<compile_context>
chip_gen: v7x
topology: tpu7x:2x2x1
jax: 0.10.0
libtpu: 0.0.40
codegen_flags: <defaults>
</compile_context>

<pallas_src>
import functools

import jax
import jax.numpy as jnp
from jax import lax
from jax.experimental import pallas as pl
from jax.experimental.pallas import tpu as pltpu

_EPS = 1e-5


# --------------------------------------------------------------------------- #
# Kernel
# --------------------------------------------------------------------------- #
def wavres_kernel(x_ref, lh_ref, rh_ref,
                  wcat_ref, wwide_ref, bcat_ref, w2_ref, wxt_ref, bout_ref,
                  o_ref, *, valid_len=None):
    """One (batch, L-tile) per grid step.  Channels on sublanes, sequence on the
    128-lane axis.  Shifted conv taps are built in-register from 2-column halos
    via lane-slice concatenation; no VMEM scratch round-trip."""
    TL = o_ref.shape[2]
    mdt = wcat_ref.dtype
    f32 = jnp.float32

    x = x_ref[0]                 # (Cin, TL)  caller dtype (f32)
    lh = lh_ref[0, 0]            # (Cin, 2)   x[t*TL-2], x[t*TL-1]     (0 at seq start)
    rh = rh_ref[0, 0]            # (Cin, 2)   x[(t+1)*TL], x[(t+1)*TL+1] (0 at seq end)

    # ---- fused wav|conv1 (k=3, 'same'), BN1 pre-folded into wcat/bcat --------
    # Shifted taps: halo column + lane-slice concatenation (no negative rolls,
    # no per-lane select masks).  Built in f32, cast only right before the dots.
    xm1 = jnp.concatenate([lh[:, 1:2], x[:, :TL - 1]], axis=1)      # x[l-1]
    xp1 = jnp.concatenate([x[:, 1:], rh[:, 0:1]], axis=1)           # x[l+1]
    x_m = x.astype(mdt)
    h = (jnp.dot(wcat_ref[0], xm1.astype(mdt), preferred_element_type=f32)
         + jnp.dot(wcat_ref[1], x_m, preferred_element_type=f32)
         + jnp.dot(wcat_ref[2], xp1.astype(mdt), preferred_element_type=f32)
         + bcat_ref[...])
    h = jnp.maximum(h, 0.0)                                         # (Cout, TL) f32

    t = pl.program_id(1)
    if valid_len is not None:
        # Ragged L: conv2 uses zero padding, so the post-ReLU activation at
        # padded positions must be exactly zero before it feeds conv2 taps.
        gpos = t * TL + lax.broadcasted_iota(jnp.int32, (1, TL), 1)
        h = jnp.where(gpos < valid_len, h, 0.0)

    # ---- the two out-of-tile activation columns: ONE wide-K dot --------------
    # global positions t*TL - 1 (left) and (t+1)*TL (right)
    cols2 = jnp.concatenate([
        jnp.concatenate([lh[:, 0:1], x[:, TL - 1:TL]], axis=1),     # tap l-1
        jnp.concatenate([lh[:, 1:2], rh[:, 0:1]], axis=1),          # tap l
        jnp.concatenate([x[:, 0:1], rh[:, 1:2]], axis=1),           # tap l+1
    ], axis=0)                                                      # (3*Cin, 2)
    hb = jnp.maximum(
        jnp.dot(wwide_ref[...], cols2.astype(mdt), preferred_element_type=f32)
        + bcat_ref[...], 0.0)                                       # (Cout, 2)
    h_left = hb[:, 0:1] * (t > 0).astype(f32)
    h_right = hb[:, 1:2] * (t < pl.num_programs(1) - 1).astype(f32)

    # ---- conv2 (k=3, padding=1, BN2 folded) + 1x1 residual + ReLU -------------
    # Residual dot first (x_m is already live); conv2 taps built just in time so
    # hm1/hp1 never coexist.
    acc = jnp.dot(wxt_ref[...], x_m, preferred_element_type=f32) + bout_ref[...]
    hm1 = jnp.concatenate([h_left, h[:, :TL - 1]], axis=1)
    acc = acc + jnp.dot(w2_ref[0], hm1.astype(mdt), preferred_element_type=f32)
    acc = acc + jnp.dot(w2_ref[1], h.astype(mdt), preferred_element_type=f32)
    hp1 = jnp.concatenate([h[:, 1:], h_right], axis=1)
    acc = acc + jnp.dot(w2_ref[2], hp1.astype(mdt), preferred_element_type=f32)

    o_ref[0] = jnp.maximum(acc, 0.0).astype(o_ref.dtype)


# --------------------------------------------------------------------------- #
# Parameter prep (BN folding + branch fusion)
# --------------------------------------------------------------------------- #
def fold_params(raw, matmul_dtype):
    (Wwav, bwav, W1, b1, g1, be1, m1, v1,
     W2, b2, g2, be2, m2, v2, Wxt, bxt) = raw

    s1 = g1 / jnp.sqrt(v1 + _EPS)
    t1 = be1 - m1 * s1
    s2 = g2 / jnp.sqrt(v2 + _EPS)
    t2 = be2 - m2 * s2

    # fuse wav|conv1 along output channels and fold BN1
    Wc = jnp.concatenate([Wwav, W1], axis=0) * s1[:, None, None]    # (Cout, Cin, 3)
    bc = jnp.concatenate([bwav, b1], axis=0) * s1 + t1               # (Cout,)
    # fold BN2 into conv2
    W2f = W2 * s2[:, None, None]                                     # (Cout, Cout, 3)
    b2f = b2 * s2 + t2

    Wcat = jnp.transpose(Wc, (2, 0, 1)).astype(matmul_dtype)         # (3, Cout, Cin)
    Wwide = jnp.concatenate([Wc[:, :, 0], Wc[:, :, 1], Wc[:, :, 2]],
                            axis=1).astype(matmul_dtype)             # (Cout, 3*Cin)
    W2k = jnp.transpose(W2f, (2, 0, 1)).astype(matmul_dtype)         # (3, Cout, Cout)
    Wxtk = Wxt[:, :, 0].astype(matmul_dtype)                         # (Cout, Cin)
    bout = (b2f + bxt)[:, None].astype(jnp.float32)                  # conv2 + residual bias
    return (Wcat, Wwide, bc[:, None].astype(jnp.float32), W2k, Wxtk, bout)


def _pick_tile_l(B, Cin, Cout, Lp, tile_l, in_bytes, out_bytes):
    if tile_l is not None:
        if Lp % tile_l != 0 or tile_l % 128 != 0:
            raise ValueError("tile_l must be a multiple of 128 that divides the padded L")
        return tile_l
    # VMEM budget: double-buffered input + output tiles, well under the 32 MiB
    # scoped default everywhere (and far under v7x's 64 MiB physical VMEM).
    budget = 24 * 1024 * 1024
    per_col = 2 * (Cin * in_bytes + Cout * out_bytes)
    max_tl = max(128, (budget // max(per_col, 1)) // 128 * 128)
    target = min(4096, max_tl)

    def largest_divisor(limit):
        best = 128
        for cand in range(128, min(Lp, limit) + 1, 128):
            if Lp % cand == 0:
                best = cand
        return best

    tl = largest_divisor(target)
    # v7x has two TensorCores: make sure there are >= 2 grid programs if possible.
    if B * (Lp // tl) < 2 and Lp >= 256:
        tl = largest_divisor(Lp // 2)
    return tl


# --------------------------------------------------------------------------- #
# Wrapper
# --------------------------------------------------------------------------- #
def wavres_block(x_ncl, raw_params, *, tile_l=None,
                 matmul_dtype=jnp.bfloat16, out_dtype=jnp.float32):
    """x_ncl: (B, Cin, L) float32 (PyTorch Conv1d layout). Returns (B, Cout, L)."""
    B, Cin, L = x_ncl.shape
    Cout = raw_params[8].shape[0]          # W2 is (Cout, Cout, 3)
    Wcat, Wwide, bcat, W2k, Wxtk, bout = fold_params(raw_params, matmul_dtype)

    # Pad L up to a lane-dense multiple of 128 (never a lane-sparse output tile).
    Lp = ((L + 127) // 128) * 128
    x = x_ncl if Lp == L else jnp.pad(x_ncl, ((0, 0), (0, 0), (0, Lp - L)))

    TL = _pick_tile_l(B, Cin, Cout, Lp, tile_l,
                      jnp.dtype(x.dtype).itemsize, jnp.dtype(out_dtype).itemsize)
    nL = Lp // TL

    # Halos: only the 2 edge columns of each L-tile (zero at the true seq ends);
    # no full-length pad/copy passes over x.
    x_t = x.reshape(B, Cin, nL, TL)
    zcol = jnp.zeros((B, Cin, 1, 2), x.dtype)
    lh = jnp.transpose(jnp.concatenate([zcol, x_t[:, :, :nL - 1, TL - 2:]], axis=2),
                       (0, 2, 1, 3))              # (B, nL, Cin, 2): x[t*TL-2], x[t*TL-1]
    rh = jnp.transpose(jnp.concatenate([x_t[:, :, 1:, :2], zcol], axis=2),
                       (0, 2, 1, 3))              # (B, nL, Cin, 2): x[(t+1)*TL], x[(t+1)*TL+1]

    def _const_spec(arr):
        zeros = (0,) * arr.ndim
        return pl.BlockSpec(arr.shape, lambda b, t, _z=zeros: _z)

    kernel = functools.partial(wavres_kernel, valid_len=None if Lp == L else L)

    out = pl.pallas_call(
        kernel,
        out_shape=jax.ShapeDtypeStruct((B, Cout, Lp), out_dtype),
        grid=(B, nL),
        in_specs=[
            pl.BlockSpec((1, Cin, TL), lambda b, t: (b, 0, t)),       # x tile (f32)
            pl.BlockSpec((1, 1, Cin, 2), lambda b, t: (b, t, 0, 0)),  # left halo
            pl.BlockSpec((1, 1, Cin, 2), lambda b, t: (b, t, 0, 0)),  # right halo
            _const_spec(Wcat), _const_spec(Wwide), _const_spec(bcat),
            _const_spec(W2k), _const_spec(Wxtk), _const_spec(bout),
        ],
        out_specs=pl.BlockSpec((1, Cout, TL), lambda b, t: (b, 0, t)),
        compiler_params=pltpu.CompilerParams(
            dimension_semantics=("parallel", "parallel"),
            vmem_limit_bytes=32 * 1024 * 1024),
    )(x, lh, rh, Wcat, Wwide, bcat, W2k, Wxtk, bout)

    return out if Lp == L else out[:, :, :L]


# --------------------------------------------------------------------------- #
# Raw (PyTorch-layout) parameters and pure-JAX reference
# --------------------------------------------------------------------------- #
def init_params(key, Cin, Cout):
    assert Cout % 2 == 0
    Ch = Cout // 2
    ks = jax.random.split(key, 8)

    # WavConv1DLayer: Haar low/high-pass taps with random channel mixing.
    haar_lo = jnp.array([0.25, 0.5, 0.25], jnp.float32)
    haar_hi = jnp.array([0.5, 0.0, -0.5], jnp.float32)
    mix_lo = 0.1 * jax.random.normal(ks[0], (Ch, Cin), jnp.float32)
    mix_hi = 0.1 * jax.random.normal(ks[1], (Ch, Cin), jnp.float32)
    Wwav = (mix_lo[:, :, None] * haar_lo[None, None, :]
            + mix_hi[:, :, None] * haar_hi[None, None, :])
    bwav = 0.01 * jax.random.normal(ks[2], (Ch,), jnp.float32)

    W1 = 0.1 * jax.random.normal(ks[3], (Ch, Cin, 3), jnp.float32)
    b1 = 0.01 * jax.random.normal(ks[4], (Ch,), jnp.float32)

    g1 = 1.0 + 0.1 * jnp.arange(Cout, dtype=jnp.float32) / Cout
    be1 = 0.01 * jnp.arange(Cout, dtype=jnp.float32)
    m1 = 0.05 * jnp.arange(Cout, dtype=jnp.float32)
    v1 = 1.0 + 0.02 * jnp.arange(Cout, dtype=jnp.float32)

    W2 = 0.1 * jax.random.normal(ks[5], (Cout, Cout, 3), jnp.float32)
    b2 = 0.01 * jax.random.normal(ks[6], (Cout,), jnp.float32)

    g2 = 1.0 - 0.05 * jnp.arange(Cout, dtype=jnp.float32) / Cout
    be2 = -0.01 * jnp.arange(Cout, dtype=jnp.float32)
    m2 = 0.02 * jnp.arange(Cout, dtype=jnp.float32)
    v2 = 1.0 + 0.01 * jnp.arange(Cout, dtype=jnp.float32)

    Wxt = 0.1 * jax.random.normal(ks[7], (Cout, Cin, 1), jnp.float32)
    bxt = jnp.zeros((Cout,), jnp.float32)

    return (Wwav, bwav, W1, b1, g1, be1, m1, v1,
            W2, b2, g2, be2, m2, v2, Wxt, bxt)


def ref_forward(x, raw):
    """Pure-JAX reference (same math, unfused, unfolded BN) for validation."""
    (Wwav, bwav, W1, b1, g1, be1, m1, v1,
     W2, b2, g2, be2, m2, v2, Wxt, bxt) = raw
    B, Cin, L = x.shape

    def conv3(inp, W, bias):                      # inp (B,C,L), W (O,C,3)
        p = jnp.pad(inp, ((0, 0), (0, 0), (1, 1)))
        acc = sum(jnp.einsum("oc,bcl->bol", W[:, :, k], p[:, :, k:k + L]) for k in range(3))
        return acc + bias[None, :, None]

    def bn(inp, g, be, m, v):
        return (inp - m[None, :, None]) / jnp.sqrt(v + _EPS)[None, :, None] \
            * g[None, :, None] + be[None, :, None]

    h = jnp.concatenate([conv3(x, Wwav, bwav), conv3(x, W1, b1)], axis=1)
    h = jnp.maximum(bn(h, g1, be1, m1, v1), 0.0)
    h2 = bn(conv3(h, W2, b2), g2, be2, m2, v2)
    xt = jnp.einsum("oc,bcl->bol", Wxt[:, :, 0], x) + bxt[None, :, None]
    return jnp.maximum(h2 + xt, 0.0)


# --------------------------------------------------------------------------- #
if __name__ == "__main__":
    B, Cin, Cout, L = 2, 4, 8, 256          # L=256 with tile_l=128 exercises L-tiling
    key = jax.random.PRNGKey(0)
    kx, kxr, kp = jax.random.split(key, 3)
    x = jax.random.normal(kx, (B, Cin, L), jnp.float32)   # PyTorch NCL layout

    raw = init_params(kp, Cin, Cout)
    y_ref = jax.block_until_ready(ref_forward(x, raw))

    # f32 matmul path with explicit 128-wide L tiles: tight check.
    y32 = jax.block_until_ready(
        wavres_block(x, raw, tile_l=128, matmul_dtype=jnp.float32))
    assert y32.shape == (B, Cout, L), y32.shape
    err32 = float(jnp.max(jnp.abs(y32 - y_ref)))
    assert err32 < 1e-4, f"f32 path max err {err32}"

    # bf16 operands / f32 MXU accumulation, bf16 output (perf path): loose check.
    ybf = jax.block_until_ready(
        wavres_block(x, raw, matmul_dtype=jnp.bfloat16, out_dtype=jnp.bfloat16))
    errbf = float(jnp.max(jnp.abs(ybf.astype(jnp.float32) - y_ref)))
    assert errbf < 1e-1, f"bf16 path max err {errbf}"

    # Ragged L (192 % 128 != 0): exercises the pad-to-128 + in-kernel mask path.
    Lr = 192
    xr = jax.random.normal(kxr, (B, Cin, Lr), jnp.float32)
    yr = jax.block_until_ready(wavres_block(xr, raw, matmul_dtype=jnp.float32))
    yr_ref = ref_forward(xr, raw)
    errr = float(jnp.max(jnp.abs(yr - yr_ref)))
    assert yr.shape == (B, Cout, Lr) and errr < 1e-4, f"ragged path max err {errr}"

    print("KERNEL_OK")
</pallas_src>

<mosaic_0001>
module attributes {stable_mosaic.version = 11 : i64} {
  func.func @wavres_kernel(%arg0: i32, %arg1: i32, %arg2: memref<1x4x128xf32, #tpu.memory_space<vmem>>, %arg3: memref<1x1x4x2xf32, #tpu.memory_space<vmem>>, %arg4: memref<1x1x4x2xf32, #tpu.memory_space<vmem>>, %arg5: memref<3x8x4xf32, #tpu.memory_space<vmem>>, %arg6: memref<8x12xf32, #tpu.memory_space<vmem>>, %arg7: memref<8x1xf32, #tpu.memory_space<vmem>>, %arg8: memref<3x8x8xf32, #tpu.memory_space<vmem>>, %arg9: memref<8x4xf32, #tpu.memory_space<vmem>>, %arg10: memref<8x1xf32, #tpu.memory_space<vmem>>, %arg11: memref<1x8x128xf32, #tpu.memory_space<vmem>>) attributes {dimension_semantics = [#tpu.dimension_semantics<parallel>, #tpu.dimension_semantics<parallel>], iteration_bounds = array<i64: 2, 2>, scalar_prefetch = 0 : i64, scratch_operands = 0 : i64, tpu.core_type = #tpu.core_type<tc>, window_params = [{transform_indices = @transform_0, window_bounds = array<i64: 1, 4, 128>}, {transform_indices = @transform_1, window_bounds = array<i64: 1, 1, 4, 2>}, {transform_indices = @transform_2, window_bounds = array<i64: 1, 1, 4, 2>}, {pipeline_mode = #tpu.pipeline_mode<synchronous>, transform_indices = @transform_3, window_bounds = array<i64: 3, 8, 4>}, {pipeline_mode = #tpu.pipeline_mode<synchronous>, transform_indices = @transform_4, window_bounds = array<i64: 8, 12>}, {pipeline_mode = #tpu.pipeline_mode<synchronous>, transform_indices = @transform_5, window_bounds = array<i64: 8, 1>}, {pipeline_mode = #tpu.pipeline_mode<synchronous>, transform_indices = @transform_6, window_bounds = array<i64: 3, 8, 8>}, {pipeline_mode = #tpu.pipeline_mode<synchronous>, transform_indices = @transform_7, window_bounds = array<i64: 8, 4>}, {pipeline_mode = #tpu.pipeline_mode<synchronous>, transform_indices = @transform_8, window_bounds = array<i64: 8, 1>}, {transform_indices = @transform_9, window_bounds = array<i64: 1, 8, 128>}]} {
    %c0 = arith.constant 0 : index
    %c0_0 = arith.constant 0 : index
    %c0_1 = arith.constant 0 : index
    %0 = vector.load %arg2[%c0, %c0_0, %c0_1] : memref<1x4x128xf32, #tpu.memory_space<vmem>>, vector<1x4x128xf32>
    %1 = vector.shape_cast %0 : vector<1x4x128xf32> to vector<4x128xf32>
    %c0_2 = arith.constant 0 : index
    %c0_3 = arith.constant 0 : index
    %c0_4 = arith.constant 0 : index
    %c0_5 = arith.constant 0 : index
    %2 = vector.load %arg3[%c0_2, %c0_3, %c0_4, %c0_5] : memref<1x1x4x2xf32, #tpu.memory_space<vmem>>, vector<1x1x4x2xf32>
    %3 = vector.shape_cast %2 : vector<1x1x4x2xf32> to vector<4x2xf32>
    %c0_6 = arith.constant 0 : index
    %c0_7 = arith.constant 0 : index
    %c0_8 = arith.constant 0 : index
    %c0_9 = arith.constant 0 : index
    %4 = vector.load %arg4[%c0_6, %c0_7, %c0_8, %c0_9] : memref<1x1x4x2xf32, #tpu.memory_space<vmem>>, vector<1x1x4x2xf32>
    %5 = vector.shape_cast %4 : vector<1x1x4x2xf32> to vector<4x2xf32>
    %6 = vector.extract_strided_slice %3 {offsets = [0, 1], sizes = [4, 1], strides = [1, 1]} : vector<4x2xf32> to vector<4x1xf32>
    %7 = vector.extract_strided_slice %1 {offsets = [0, 0], sizes = [4, 127], strides = [1, 1]} : vector<4x128xf32> to vector<4x127xf32>
    %8 = tpu.concatenate %6, %7 in 1 : vector<4x1xf32>, vector<4x127xf32> -> vector<4x128xf32>
    %9 = vector.extract_strided_slice %1 {offsets = [0, 1], sizes = [4, 127], strides = [1, 1]} : vector<4x128xf32> to vector<4x127xf32>
    %10 = vector.extract_strided_slice %5 {offsets = [0, 0], sizes = [4, 1], strides = [1, 1]} : vector<4x2xf32> to vector<4x1xf32>
    %11 = tpu.concatenate %9, %10 in 1 : vector<4x127xf32>, vector<4x1xf32> -> vector<4x128xf32>
    %c0_10 = arith.constant 0 : index
    %c0_11 = arith.constant 0 : index
    %c0_12 = arith.constant 0 : index
    %12 = vector.load %arg5[%c0_10, %c0_11, %c0_12] : memref<3x8x4xf32, #tpu.memory_space<vmem>>, vector<1x8x4xf32>
    %13 = vector.shape_cast %12 : vector<1x8x4xf32> to vector<8x4xf32>
    %cst = arith.constant dense<0.000000e+00> : vector<8x128xf32>
    %14 = tpu.matmul %13, %8, %cst {dimension_numbers = #tpu.dot_dimension_numbers<[1], [0], [0], [1], [0, 0, 1, 1], [], []>} : vector<8x4xf32>, vector<4x128xf32>, vector<8x128xf32> -> vector<8x128xf32>
    %c1 = arith.constant 1 : index
    %c0_13 = arith.constant 0 : index
    %c0_14 = arith.constant 0 : index
    %15 = vector.load %arg5[%c1, %c0_13, %c0_14] : memref<3x8x4xf32, #tpu.memory_space<vmem>>, vector<1x8x4xf32>
    %16 = vector.shape_cast %15 : vector<1x8x4xf32> to vector<8x4xf32>
    %cst_15 = arith.constant dense<0.000000e+00> : vector<8x128xf32>
    %17 = tpu.matmul %16, %1, %cst_15 {dimension_numbers = #tpu.dot_dimension_numbers<[1], [0], [0], [1], [0, 0, 1, 1], [], []>} : vector<8x4xf32>, vector<4x128xf32>, vector<8x128xf32> -> vector<8x128xf32>
    %18 = arith.addf %14, %17 : vector<8x128xf32>
    %c2 = arith.constant 2 : index
    %c0_16 = arith.constant 0 : index
    %c0_17 = arith.constant 0 : index
    %19 = vector.load %arg5[%c2, %c0_16, %c0_17] : memref<3x8x4xf32, #tpu.memory_space<vmem>>, vector<1x8x4xf32>
    %20 = vector.shape_cast %19 : vector<1x8x4xf32> to vector<8x4xf32>
    %cst_18 = arith.constant dense<0.000000e+00> : vector<8x128xf32>
    %21 = tpu.matmul %20, %11, %cst_18 {dimension_numbers = #tpu.dot_dimension_numbers<[1], [0], [0], [1], [0, 0, 1, 1], [], []>} : vector<8x4xf32>, vector<4x128xf32>, vector<8x128xf32> -> vector<8x128xf32>
    %22 = arith.addf %18, %21 : vector<8x128xf32>
    %c0_19 = arith.constant 0 : index
    %c0_20 = arith.constant 0 : index
    %23 = vector.load %arg7[%c0_19, %c0_20] : memref<8x1xf32, #tpu.memory_space<vmem>>, vector<8x1xf32>
    %24 = vector.broadcast %23 : vector<8x1xf32> to vector<8x128xf32>
    %25 = arith.addf %22, %24 : vector<8x128xf32>
    %cst_21 = arith.constant 0.000000e+00 : f32
    %26 = vector.broadcast %cst_21 : f32 to vector<8x128xf32>
    %27 = arith.maximumf %25, %26 : vector<8x128xf32>
    %28 = vector.extract_strided_slice %3 {offsets = [0, 0], sizes = [4, 1], strides = [1, 1]} : vector<4x2xf32> to vector<4x1xf32>
    %29 = vector.extract_strided_slice %1 {offsets = [0, 127], sizes = [4, 1], strides = [1, 1]} : vector<4x128xf32> to vector<4x1xf32>
    %30 = tpu.concatenate %28, %29 in 1 : vector<4x1xf32>, vector<4x1xf32> -> vector<4x2xf32>
    %31 = vector.extract_strided_slice %3 {offsets = [0, 1], sizes = [4, 1], strides = [1, 1]} : vector<4x2xf32> to vector<4x1xf32>
    %32 = vector.extract_strided_slice %5 {offsets = [0, 0], sizes = [4, 1], strides = [1, 1]} : vector<4x2xf32> to vector<4x1xf32>
    %33 = tpu.concatenate %31, %32 in 1 : vector<4x1xf32>, vector<4x1xf32> -> vector<4x2xf32>
    %34 = vector.extract_strided_slice %1 {offsets = [0, 0], sizes = [4, 1], strides = [1, 1]} : vector<4x128xf32> to vector<4x1xf32>
    %35 = vector.extract_strided_slice %5 {offsets = [0, 1], sizes = [4, 1], strides = [1, 1]} : vector<4x2xf32> to vector<4x1xf32>
    %36 = tpu.concatenate %34, %35 in 1 : vector<4x1xf32>, vector<4x1xf32> -> vector<4x2xf32>
    %37 = tpu.concatenate %30, %33, %36 in 0 : vector<4x2xf32>, vector<4x2xf32>, vector<4x2xf32> -> vector<12x2xf32>
    %c0_22 = arith.constant 0 : index
    %c0_23 = arith.constant 0 : index
    %38 = vector.load %arg6[%c0_22, %c0_23] : memref<8x12xf32, #tpu.memory_space<vmem>>, vector<8x12xf32>
    %cst_24 = arith.constant dense<0.000000e+00> : vector<8x2xf32>
    %39 = tpu.matmul %38, %37, %cst_24 {dimension_numbers = #tpu.dot_dimension_numbers<[1], [0], [0], [1], [0, 0, 1, 1], [], []>} : vector<8x12xf32>, vector<12x2xf32>, vector<8x2xf32> -> vector<8x2xf32>
    %c0_25 = arith.constant 0 : index
    %c0_26 = arith.constant 0 : index
    %40 = vector.load %arg7[%c0_25, %c0_26] : memref<8x1xf32, #tpu.memory_space<vmem>>, vector<8x1xf32>
    %41 = vector.broadcast %40 : vector<8x1xf32> to vector<8x2xf32>
    %42 = arith.addf %39, %41 : vector<8x2xf32>
    %cst_27 = arith.constant 0.000000e+00 : f32
    %43 = vector.broadcast %cst_27 : f32 to vector<8x2xf32>
    %44 = arith.maximumf %42, %43 : vector<8x2xf32>
    %45 = vector.extract_strided_slice %44 {offsets = [0, 0], sizes = [8, 1], strides = [1, 1]} : vector<8x2xf32> to vector<8x1xf32>
    %c0_i32 = arith.constant 0 : i32
    %46 = arith.cmpi sgt, %arg1, %c0_i32 : i32
    %47 = arith.extui %46 : i1 to i32
    %48 = arith.sitofp %47 : i32 to f32
    %49 = vector.broadcast %48 : f32 to vector<8x1xf32>
    %50 = arith.mulf %45, %49 : vector<8x1xf32>
    %51 = vector.extract_strided_slice %44 {offsets = [0, 1], sizes = [8, 1], strides = [1, 1]} : vector<8x2xf32> to vector<8x1xf32>
    %c1_i32 = arith.constant 1 : i32
    %52 = arith.cmpi slt, %arg1, %c1_i32 : i32
    %53 = arith.extui %52 : i1 to i32
    %54 = arith.sitofp %53 : i32 to f32
    %55 = vector.broadcast %54 : f32 to vector<8x1xf32>
    %56 = arith.mulf %51, %55 : vector<8x1xf32>
    %c0_28 = arith.constant 0 : index
    %c0_29 = arith.constant 0 : index
    %57 = vector.load %arg9[%c0_28, %c0_29] : memref<8x4xf32, #tpu.memory_space<vmem>>, vector<8x4xf32>
    %cst_30 = arith.constant dense<0.000000e+00> : vector<8x128xf32>
    %58 = tpu.matmul %57, %1, %cst_30 {dimension_numbers = #tpu.dot_dimension_numbers<[1], [0], [0], [1], [0, 0, 1, 1], [], []>} : vector<8x4xf32>, vector<4x128xf32>, vector<8x128xf32> -> vector<8x128xf32>
    %c0_31 = arith.constant 0 : index
    %c0_32 = arith.constant 0 : index
    %59 = vector.load %arg10[%c0_31, %c0_32] : memref<8x1xf32, #tpu.memory_space<vmem>>, vector<8x1xf32>
    %60 = vector.broadcast %59 : vector<8x1xf32> to vector<8x128xf32>
    %61 = arith.addf %58, %60 : vector<8x128xf32>
    %62 = vector.extract_strided_slice %27 {offsets = [0, 0], sizes = [8, 127], strides = [1, 1]} : vector<8x128xf32> to vector<8x127xf32>
    %63 = tpu.concatenate %50, %62 in 1 : vector<8x1xf32>, vector<8x127xf32> -> vector<8x128xf32>
    %c0_33 = arith.constant 0 : index
    %c0_34 = arith.constant 0 : index
    %c0_35 = arith.constant 0 : index
    %64 = vector.load %arg8[%c0_33, %c0_34, %c0_35] : memref<3x8x8xf32, #tpu.memory_space<vmem>>, vector<1x8x8xf32>
    %65 = vector.shape_cast %64 : vector<1x8x8xf32> to vector<8x8xf32>
    %cst_36 = arith.constant dense<0.000000e+00> : vector<8x128xf32>
    %66 = tpu.matmul %65, %63, %cst_36 {dimension_numbers = #tpu.dot_dimension_numbers<[1], [0], [0], [1], [0, 0, 1, 1], [], []>} : vector<8x8xf32>, vector<8x128xf32>, vector<8x128xf32> -> vector<8x128xf32>
    %67 = arith.addf %61, %66 : vector<8x128xf32>
    %c1_37 = arith.constant 1 : index
    %c0_38 = arith.constant 0 : index
    %c0_39 = arith.constant 0 : index
    %68 = vector.load %arg8[%c1_37, %c0_38, %c0_39] : memref<3x8x8xf32, #tpu.memory_space<vmem>>, vector<1x8x8xf32>
    %69 = vector.shape_cast %68 : vector<1x8x8xf32> to vector<8x8xf32>
    %cst_40 = arith.constant dense<0.000000e+00> : vector<8x128xf32>
    %70 = tpu.matmul %69, %27, %cst_40 {dimension_numbers = #tpu.dot_dimension_numbers<[1], [0], [0], [1], [0, 0, 1, 1], [], []>} : vector<8x8xf32>, vector<8x128xf32>, vector<8x128xf32> -> vector<8x128xf32>
    %71 = arith.addf %67, %70 : vector<8x128xf32>
    %72 = vector.extract_strided_slice %27 {offsets = [0, 1], sizes = [8, 127], strides = [1, 1]} : vector<8x128xf32> to vector<8x127xf32>
    %73 = tpu.concatenate %72, %56 in 1 : vector<8x127xf32>, vector<8x1xf32> -> vector<8x128xf32>
    %c2_41 = arith.constant 2 : index
    %c0_42 = arith.constant 0 : index
    %c0_43 = arith.constant 0 : index
    %74 = vector.load %arg8[%c2_41, %c0_42, %c0_43] : memref<3x8x8xf32, #tpu.memory_space<vmem>>, vector<1x8x8xf32>
    %75 = vector.shape_cast %74 : vector<1x8x8xf32> to vector<8x8xf32>
    %cst_44 = arith.constant dense<0.000000e+00> : vector<8x128xf32>
    %76 = tpu.matmul %75, %73, %cst_44 {dimension_numbers = #tpu.dot_dimension_numbers<[1], [0], [0], [1], [0, 0, 1, 1], [], []>} : vector<8x8xf32>, vector<8x128xf32>, vector<8x128xf32> -> vector<8x128xf32>
    %77 = arith.addf %71, %76 : vector<8x128xf32>
    %cst_45 = arith.constant 0.000000e+00 : f32
    %78 = vector.broadcast %cst_45 : f32 to vector<8x128xf32>
    %79 = arith.maximumf %77, %78 : vector<8x128xf32>
    %c0_46 = arith.constant 0 : index
    %c0_47 = arith.constant 0 : index
    %c0_48 = arith.constant 0 : index
    %80 = vector.load %arg11[%c0_46, %c0_47, %c0_48] : memref<1x8x128xf32, #tpu.memory_space<vmem>>, vector<1x8x128xf32>
    %81 = vector.shape_cast %80 : vector<1x8x128xf32> to vector<8x128xf32>
    %82 = vector.shape_cast %79 : vector<8x128xf32> to vector<1x8x128xf32>
    tpu.vector_store %arg11[%c0_46, %c0_47, %c0_48], %82 {strides = array<i32>} : memref<1x8x128xf32, #tpu.memory_space<vmem>>, vector<1x8x128xf32>,
    return
  }
  func.func @transform_0(%arg0: i32, %arg1: i32) -> (i32, i32, i32) {
    %c0_i32 = arith.constant 0 : i32
    %c0_i32_0 = arith.constant 0 : i32
    return %arg0, %c0_i32, %arg1 : i32, i32, i32
  }
  func.func @transform_1(%arg0: i32, %arg1: i32) -> (i32, i32, i32, i32) {
    %c0_i32 = arith.constant 0 : i32
    %c0_i32_0 = arith.constant 0 : i32
    %c0_i32_1 = arith.constant 0 : i32
    return %arg0, %arg1, %c0_i32, %c0_i32_0 : i32, i32, i32, i32
  }
  func.func @transform_2(%arg0: i32, %arg1: i32) -> (i32, i32, i32, i32) {
    %c0_i32 = arith.constant 0 : i32
    %c0_i32_0 = arith.constant 0 : i32
    %c0_i32_1 = arith.constant 0 : i32
    return %arg0, %arg1, %c0_i32, %c0_i32_0 : i32, i32, i32, i32
  }
  func.func @transform_3(%arg0: i32, %arg1: i32) -> (i32, i32, i32) {
    %c0_i32 = arith.constant 0 : i32
    %c0_i32_0 = arith.constant 0 : i32
    %c0_i32_1 = arith.constant 0 : i32
    %c0_i32_2 = arith.constant 0 : i32
    return %c0_i32, %c0_i32_0, %c0_i32_1 : i32, i32, i32
  }
  func.func @transform_4(%arg0: i32, %arg1: i32) -> (i32, i32) {
    %c0_i32 = arith.constant 0 : i32
    %c0_i32_0 = arith.constant 0 : i32
    %c0_i32_1 = arith.constant 0 : i32
    return %c0_i32, %c0_i32_0 : i32, i32
  }
  func.func @transform_5(%arg0: i32, %arg1: i32) -> (i32, i32) {
    %c0_i32 = arith.constant 0 : i32
    %c0_i32_0 = arith.constant 0 : i32
    %c0_i32_1 = arith.constant 0 : i32
    return %c0_i32, %c0_i32_0 : i32, i32
  }
  func.func @transform_6(%arg0: i32, %arg1: i32) -> (i32, i32, i32) {
    %c0_i32 = arith.constant 0 : i32
    %c0_i32_0 = arith.constant 0 : i32
    %c0_i32_1 = arith.constant 0 : i32
    %c0_i32_2 = arith.constant 0 : i32
    return %c0_i32, %c0_i32_0, %c0_i32_1 : i32, i32, i32
  }
  func.func @transform_7(%arg0: i32, %arg1: i32) -> (i32, i32) {
    %c0_i32 = arith.constant 0 : i32
    %c0_i32_0 = arith.constant 0 : i32
    %c0_i32_1 = arith.constant 0 : i32
    return %c0_i32, %c0_i32_0 : i32, i32
  }
  func.func @transform_8(%arg0: i32, %arg1: i32) -> (i32, i32) {
    %c0_i32 = arith.constant 0 : i32
    %c0_i32_0 = arith.constant 0 : i32
    %c0_i32_1 = arith.constant 0 : i32
    return %c0_i32, %c0_i32_0 : i32, i32
  }
  func.func @transform_9(%arg0: i32, %arg1: i32) -> (i32, i32, i32) {
    %c0_i32 = arith.constant 0 : i32
    %c0_i32_0 = arith.constant 0 : i32
    return %arg0, %c0_i32, %arg1 : i32, i32, i32
  }
}

</mosaic_0001>

<llo_original>
// kernel: tpu_custom_call.1
$region0: #{tpu_custom_call.1}
  #allocation0 [shape = 'u32[]', space=smem, size = 0x4, offset = 0x4, fixed_abs, tag = 'smem constant byte address 0x4 - core index']
  #allocation1 [shape = 'u32[144,128]{1,0:T(1,128)}', space=vmem, size = 0x12000, scoped, tag = 'internal scratch']
  %s0 = inlined_call_operand.vmem [shape: f32[2,4,256], index: 0, kind: input, shape index: {}]
  %s1 = inlined_call_operand.vmem [shape: f32[2,2,4,2], index: 1, kind: input, shape index: {}]
  %s2 = inlined_call_operand.vmem [shape: f32[2,2,4,2], index: 2, kind: input, shape index: {}]
  %s3 = inlined_call_operand.vmem [shape: f32[3,8,4], index: 3, kind: input, shape index: {}]
  %s4 = inlined_call_operand.vmem [shape: f32[8,12], index: 4, kind: input, shape index: {}]
  %s5 = inlined_call_operand.vmem [shape: f32[8,1], index: 5, kind: input, shape index: {}]
  %s6 = inlined_call_operand.vmem [shape: f32[3,8,8], index: 6, kind: input, shape index: {}]
  %s7 = inlined_call_operand.vmem [shape: f32[8,4], index: 7, kind: input, shape index: {}]
  %s8 = inlined_call_operand.vmem [shape: f32[8,1], index: 8, kind: input, shape index: {}]
  %s9 = inlined_call_operand.hbm [shape: f32[2,8,256], index: 9, kind: output, shape index: {}]
  %s10 = sld [smem:[#allocation0]]
  $region69: #{tpu_custom_call.1} parent=0
    _
  %s12 = ssub.s32 1, %s10
  %s13 = scalar_select 0, %s12, %s10
  $region1: #{tpu_custom_call.1} parent=0
    #allocation2 [shape = 'u8[8192]{0}', space=vmem, size = 0x2000, scoped, tag = 'output window, operand 0']
    #allocation3 [shape = 's32[2]{0}', space=sflag, size = 0x8, scoped, tag = 'scoped memory for tpu_custom_call.1']
    %14 = vsyncpa [#allocation3], 0
    %s15 = scalar_lea.sflag [#allocation3], 1
    %16 = vsyncpa %s15, 0
    loop: start=0, step=1, limit=6
    $region2: #{tpu_custom_call.1} parent=1 // loop_pre_header
      _
    $region3: #{tpu_custom_call.1} parent=1 // loop_header
      %s18 = sphi 0, %s22
      %p19 = scmp.ge.s32.totalorder %s18, 6
      %s25 = sphi 0, %s37
      %s26 = sphi 0, %s33
      %s27 = sphi 0, %s25
      %s28 = sphi 0, %s26
      %s29 = sphi 0, %s27
      %s30 = sphi 0, %s28
      %s42 = sphi 0, %s44
      %s45 = sphi 0, %s42
      %s46 = sphi 0, %s45
      %s62 = sphi 0, %s46
      %s70 = sphi 0, %s72
      %s73 = sphi 0, %s70
      %s74 = sphi 0, %s73
      %s90 = sphi 0, %s74
      %s98 = sphi 0, %s100
      %s101 = sphi 0, %s98
      %s102 = sphi 0, %s101
      %s118 = sphi 0, %s102
      %s122 = sphi 0, %s122
      %s124 = sphi 0, %s122
      %s125 = sphi 0, %s124
      %s139 = sphi 0, %s125
      %s143 = sphi 0, %s143
      %s145 = sphi 0, %s143
      %s146 = sphi 0, %s145
      %s160 = sphi 0, %s146
      %s164 = sphi 0, %s164
      %s166 = sphi 0, %s164
      %s167 = sphi 0, %s166
      %s181 = sphi 0, %s167
      %s185 = sphi 0, %s185
      %s187 = sphi 0, %s185
      %s188 = sphi 0, %s187
      %s202 = sphi 0, %s188
      %s206 = sphi 0, %s206
      %s208 = sphi 0, %s206
      %s209 = sphi 0, %s208
      %s223 = sphi 0, %s209
      %s227 = sphi 0, %s227
      %s229 = sphi 0, %s227
      %s230 = sphi 0, %s229
      %s244 = sphi 0, %s230
      %s252 = sphi 0, %s254
      %s255 = sphi 0, %s252
      %s256 = sphi 0, %s255
      %s272 = sphi 0, %s256
    $region4: #{tpu_custom_call.1} parent=1 // loop_header_branch
      %21 = sbr.rel (%p19) target = $region8
    $region5: #{tpu_custom_call.1} parent=1 // loop_body
      %s23 = ssub.s32 %s18, 1
      %s24 = ssub.s32 %s18, 2
      %s31 = sadd.s32 1, %s26
      %p32 = scmp.ge.s32.totalorder %s31, 2
      %s33 = scalar_select %p32, 0, %s31
      %s34 = sadd.s32 1, %s25
      %s35 = scalar_select %p32, %s34, %s25
      %p36 = scmp.ge.s32.totalorder %s35, 2
      %s37 = scalar_select %p36, 0, %s35
      %s38 = ssub.s32 %s25, %s37
      %s39 = ssub.s32 %s26, %s33
      %s40 = sor.u32 %s38, %s39
      %p41 = scmp.eq.s32.totalorder %s40, 0
      %s43 = sadd.s32 %s42, 1
      %s44 = scalar_select %p41, %s42, %s43
      %p47 = pneg %p41
      %p48 = scmp.eq.s32.totalorder %s18, 3
      %p49 = por %p47, %p48
      %p50 = scmp.ne.s32.totalorder %s42, %s45
      %p51 = scmp.eq.s32.totalorder %s18, 0
      %p52 = por %p50, %p51
      %p53 = scmp.ne.s32.totalorder %s42, %s45
      %p54 = scmp.eq.s32.totalorder %s23, 3
      %p55 = por %p53, %p54
      %p56 = scmp.ne.s32.totalorder %s45, %s46
      %p57 = scmp.eq.s32.totalorder %s23, 0
      %p58 = por %p56, %p57
      %p59 = scmp.ne.s32.totalorder %s45, %s46
      %p60 = scmp.eq.s32.totalorder %s24, 3
      %p61 = por %p59, %p60
      %p63 = scmp.ne.s32.totalorder %s46, %s62
      %p64 = scmp.eq.s32.totalorder %s24, 0
      %p65 = por %p63, %p64
      %s66 = ssub.s32 %s25, %s37
      %s67 = ssub.s32 %s26, %s33
      %s68 = sor.u32 %s66, %s67
      %p69 = scmp.eq.s32.totalorder %s68, 0
      %s71 = sadd.s32 %s70, 1
      %s72 = scalar_select %p69, %s70, %s71
      %p75 = pneg %p69
      %p76 = scmp.eq.s32.totalorder %s18, 3
      %p77 = por %p75, %p76
      %p78 = scmp.ne.s32.totalorder %s70, %s73
      %p79 = scmp.eq.s32.totalorder %s18, 0
      %p80 = por %p78, %p79
      %p81 = scmp.ne.s32.totalorder %s70, %s73
      %p82 = scmp.eq.s32.totalorder %s23, 3
      %p83 = por %p81, %p82
      %p84 = scmp.ne.s32.totalorder %s73, %s74
      %p85 = scmp.eq.s32.totalorder %s23, 0
      %p86 = por %p84, %p85
      %p87 = scmp.ne.s32.totalorder %s73, %s74
      %p88 = scmp.eq.s32.totalorder %s24, 3
      %p89 = por %p87, %p88
      %p91 = scmp.ne.s32.totalorder %s74, %s90
      %p92 = scmp.eq.s32.totalorder %s24, 0
      %p93 = por %p91, %p92
      %s94 = ssub.s32 %s25, %s37
      %s95 = ssub.s32 %s26, %s33
      %s96 = sor.u32 %s94, %s95
      %p97 = scmp.eq.s32.totalorder %s96, 0
      %s99 = sadd.s32 %s98, 1
      %s100 = scalar_select %p97, %s98, %s99
      %p103 = pneg %p97
      %p104 = scmp.eq.s32.totalorder %s18, 3
      %p105 = por %p103, %p104
      %p106 = scmp.ne.s32.totalorder %s98, %s101
      %p107 = scmp.eq.s32.totalorder %s18, 0
      %p108 = por %p106, %p107
      %p109 = scmp.ne.s32.totalorder %s98, %s101
      %p110 = scmp.eq.s32.totalorder %s23, 3
      %p111 = por %p109, %p110
      %p112 = scmp.ne.s32.totalorder %s101, %s102
      %p113 = scmp.eq.s32.totalorder %s23, 0
      %p114 = por %p112, %p113
      %p115 = scmp.ne.s32.totalorder %s101, %s102
      %p116 = scmp.eq.s32.totalorder %s24, 3
      %p117 = por %p115, %p116
      %p119 = scmp.ne.s32.totalorder %s102, %s118
      %p120 = scmp.eq.s32.totalorder %s24, 0
      %p121 = por %p119, %p120
      %s123 = sadd.s32 %s122, 1
      %p126 = scmp.eq.s32.totalorder %s18, 3
      %p127 = scmp.ne.s32.totalorder %s122, %s124
      %p128 = scmp.eq.s32.totalorder %s18, 0
      %p129 = por %p127, %p128
      %p130 = scmp.ne.s32.totalorder %s122, %s124
      %p131 = scmp.eq.s32.totalorder %s23, 3
      %p132 = por %p130, %p131
      %p133 = scmp.ne.s32.totalorder %s124, %s125
      %p134 = scmp.eq.s32.totalorder %s23, 0
      %p135 = por %p133, %p134
      %p136 = scmp.ne.s32.totalorder %s124, %s125
      %p137 = scmp.eq.s32.totalorder %s24, 3
      %p138 = por %p136, %p137
      %p140 = scmp.ne.s32.totalorder %s125, %s139
      %p141 = scmp.eq.s32.totalorder %s24, 0
      %p142 = por %p140, %p141
      %s144 = sadd.s32 %s143, 1
      %p147 = scmp.eq.s32.totalorder %s18, 3
      %p148 = scmp.ne.s32.totalorder %s143, %s145
      %p149 = scmp.eq.s32.totalorder %s18, 0
      %p150 = por %p148, %p149
      %p151 = scmp.ne.s32.totalorder %s143, %s145
      %p152 = scmp.eq.s32.totalorder %s23, 3
      %p153 = por %p151, %p152
      %p154 = scmp.ne.s32.totalorder %s145, %s146
      %p155 = scmp.eq.s32.totalorder %s23, 0
      %p156 = por %p154, %p155
      %p157 = scmp.ne.s32.totalorder %s145, %s146
      %p158 = scmp.eq.s32.totalorder %s24, 3
      %p159 = por %p157, %p158
      %p161 = scmp.ne.s32.totalorder %s146, %s160
      %p162 = scmp.eq.s32.totalorder %s24, 0
      %p163 = por %p161, %p162
      %s165 = sadd.s32 %s164, 1
      %p168 = scmp.eq.s32.totalorder %s18, 3
      %p169 = scmp.ne.s32.totalorder %s164, %s166
      %p170 = scmp.eq.s32.totalorder %s18, 0
      %p171 = por %p169, %p170
      %p172 = scmp.ne.s32.totalorder %s164, %s166
      %p173 = scmp.eq.s32.totalorder %s23, 3
      %p174 = por %p172, %p173
      %p175 = scmp.ne.s32.totalorder %s166, %s167
      %p176 = scmp.eq.s32.totalorder %s23, 0
      %p177 = por %p175, %p176
      %p178 = scmp.ne.s32.totalorder %s166, %s167
      %p179 = scmp.eq.s32.totalorder %s24, 3
      %p180 = por %p178, %p179
      %p182 = scmp.ne.s32.totalorder %s167, %s181
      %p183 = scmp.eq.s32.totalorder %s24, 0
      %p184 = por %p182, %p183
      %s186 = sadd.s32 %s185, 1
      %p189 = scmp.eq.s32.totalorder %s18, 3
      %p190 = scmp.ne.s32.totalorder %s185, %s187
      %p191 = scmp.eq.s32.totalorder %s18, 0
      %p192 = por %p190, %p191
      %p193 = scmp.ne.s32.totalorder %s185, %s187
      %p194 = scmp.eq.s32.totalorder %s23, 3
      %p195 = por %p193, %p194
      %p196 = scmp.ne.s32.totalorder %s187, %s188
      %p197 = scmp.eq.s32.totalorder %s23, 0
      %p198 = por %p196, %p197
      %p199 = scmp.ne.s32.totalorder %s187, %s188
      %p200 = scmp.eq.s32.totalorder %s24, 3
      %p201 = por %p199, %p200
      %p203 = scmp.ne.s32.totalorder %s188, %s202
      %p204 = scmp.eq.s32.totalorder %s24, 0
      %p205 = por %p203, %p204
      %s207 = sadd.s32 %s206, 1
      %p210 = scmp.eq.s32.totalorder %s18, 3
      %p211 = scmp.ne.s32.totalorder %s206, %s208
      %p212 = scmp.eq.s32.totalorder %s18, 0
      %p213 = por %p211, %p212
      %p214 = scmp.ne.s32.totalorder %s206, %s208
      %p215 = scmp.eq.s32.totalorder %s23, 3
      %p216 = por %p214, %p215
      %p217 = scmp.ne.s32.totalorder %s208, %s209
      %p218 = scmp.eq.s32.totalorder %s23, 0
      %p219 = por %p217, %p218
      %p220 = scmp.ne.s32.totalorder %s208, %s209
      %p221 = scmp.eq.s32.totalorder %s24, 3
      %p222 = por %p220, %p221
      %p224 = scmp.ne.s32.totalorder %s209, %s223
      %p225 = scmp.eq.s32.totalorder %s24, 0
      %p226 = por %p224, %p225
      %s228 = sadd.s32 %s227, 1
      %p231 = scmp.eq.s32.totalorder %s18, 3
      %p232 = scmp.ne.s32.totalorder %s227, %s229
      %p233 = scmp.eq.s32.totalorder %s18, 0
      %p234 = por %p232, %p233
      %p235 = scmp.ne.s32.totalorder %s227, %s229
      %p236 = scmp.eq.s32.totalorder %s23, 3
      %p237 = por %p235, %p236
      %p238 = scmp.ne.s32.totalorder %s229, %s230
      %p239 = scmp.eq.s32.totalorder %s23, 0
      %p240 = por %p238, %p239
      %p241 = scmp.ne.s32.totalorder %s229, %s230
      %p242 = scmp.eq.s32.totalorder %s24, 3
      %p243 = por %p241, %p242
      %p245 = scmp.ne.s32.totalorder %s230, %s244
      %p246 = scmp.eq.s32.totalorder %s24, 0
      %p247 = por %p245, %p246
      %s248 = ssub.s32 %s25, %s37
      %s249 = ssub.s32 %s26, %s33
      %s250 = sor.u32 %s248, %s249
      %p251 = scmp.eq.s32.totalorder %s250, 0
      %s253 = sadd.s32 %s252, 1
      %s254 = scalar_select %p251, %s252, %s253
      %p257 = pneg %p251
      %p258 = scmp.eq.s32.totalorder %s18, 3
      %p259 = por %p257, %p258
      %p260 = scmp.ne.s32.totalorder %s252, %s255
      %p261 = scmp.eq.s32.totalorder %s18, 0
      %p262 = por %p260, %p261
      %p263 = scmp.ne.s32.totalorder %s252, %s255
      %p264 = scmp.eq.s32.totalorder %s23, 3
      %p265 = por %p263, %p264
      %p266 = scmp.ne.s32.totalorder %s255, %s256
      %p267 = scmp.eq.s32.totalorder %s23, 0
      %p268 = por %p266, %p267
      %p269 = scmp.ne.s32.totalorder %s255, %s256
      %p270 = scmp.eq.s32.totalorder %s24, 3
      %p271 = por %p269, %p270
      %p273 = scmp.ne.s32.totalorder %s256, %s272
      %p274 = scmp.eq.s32.totalorder %s24, 0
      %p275 = por %p273, %p274
      %p276 = scmp.le.s32.totalorder 1, %s18
      %p277 = scmp.lt.s32.totalorder %s18, 5
      %p278 = pnand %p276, %p277
      %p279 = pneg %p278
      // Predicated region
      $region9: #{tpu_custom_call.1} parent=5 // pred_check
        _
      $region10: #{tpu_custom_call.1} parent=5 // pred_check_branch
        %281 = sbr.rel (%p278) target = $region12
      $region11: #{tpu_custom_call.1} parent=5 // pred_region
        %s282 = ssub.s32 %s18, 1
        // Predicated region
        $region13: #{tpu_custom_call.1} parent=11 // pred_check
          %p283 = pneg %p135
        $region14: #{tpu_custom_call.1} parent=11 // pred_check_branch
          %285 = sbr.rel (%p283) target = $region16
        $region15: #{tpu_custom_call.1} parent=11 // pred_region
          _
        $region16: #{tpu_custom_call.1} parent=11 // pred_fallthru
          _
        // Predicated region
        $region17: #{tpu_custom_call.1} parent=11 // pred_check
          %p286 = pneg %p156
        $region18: #{tpu_custom_call.1} parent=11 // pred_check_branch
          %288 = sbr.rel (%p286) target = $region20
        $region19: #{tpu_custom_call.1} parent=11 // pred_region
          _
        $region20: #{tpu_custom_call.1} parent=11 // pred_fallthru
          _
        // Predicated region
        $region21: #{tpu_custom_call.1} parent=11 // pred_check
          %p289 = pneg %p177
        $region22: #{tpu_custom_call.1} parent=11 // pred_check_branch
          %291 = sbr.rel (%p289) target = $region24
        $region23: #{tpu_custom_call.1} parent=11 // pred_region
          _
        $region24: #{tpu_custom_call.1} parent=11 // pred_fallthru
          _
        // Predicated region
        $region25: #{tpu_custom_call.1} parent=11 // pred_check
          %p292 = pneg %p198
        $region26: #{tpu_custom_call.1} parent=11 // pred_check_branch
          %294 = sbr.rel (%p292) target = $region28
        $region27: #{tpu_custom_call.1} parent=11 // pred_region
          _
        $region28: #{tpu_custom_call.1} parent=11 // pred_fallthru
          _
        // Predicated region
        $region29: #{tpu_custom_call.1} parent=11 // pred_check
          %p295 = pneg %p219
        $region30: #{tpu_custom_call.1} parent=11 // pred_check_branch
          %297 = sbr.rel (%p295) target = $region32
        $region31: #{tpu_custom_call.1} parent=11 // pred_region
          _
        $region32: #{tpu_custom_call.1} parent=11 // pred_fallthru
          _
        // Predicated region
        $region33: #{tpu_custom_call.1} parent=11 // pred_check
          %p298 = pneg %p240
        $region34: #{tpu_custom_call.1} parent=11 // pred_check_branch
          %300 = sbr.rel (%p298) target = $region36
        $region35: #{tpu_custom_call.1} parent=11 // pred_region
          _
        $region36: #{tpu_custom_call.1} parent=11 // pred_fallthru
          _
      $region12: #{tpu_custom_call.1} parent=5 // pred_fallthru
        _
      %p301 = scmp.lt.s32.totalorder %s18, 4
      // Predicated region
      $region37: #{tpu_custom_call.1} parent=5 // pred_check
        %p302 = pneg %p301
      $region38: #{tpu_custom_call.1} parent=5 // pred_check_branch
        %304 = sbr.rel (%p302) target = $region40
      $region39: #{tpu_custom_call.1} parent=5 // pred_region
        // Predicated region
        $region41: #{tpu_custom_call.1} parent=39 // pred_check
          %p305 = pneg %p52
        $region42: #{tpu_custom_call.1} parent=39 // pred_check_branch
          %307 = sbr.rel (%p305) target = $region44
        $region43: #{tpu_custom_call.1} parent=39 // pred_region
          %p308 = scmp.lt.s32.totalorder %s25, 1
          %s309 = scalar_select %p308, %s25, 1
          %p310 = scmp.lt.s32.totalorder %s26, 1
          %s311 = scalar_select %p310, %s26, 1
          %s312 = smul.addr %s309, 2
          %s313 = sadd.s32 %s311, %s312
          %s314 = smul.addr %s313, 4
          %s315 = scalar_lea.vmem %s0, %s314
        $region44: #{tpu_custom_call.1} parent=39 // pred_fallthru
          _
        // Predicated region
        $region45: #{tpu_custom_call.1} parent=39 // pred_check
          %p316 = pneg %p80
        $region46: #{tpu_custom_call.1} parent=39 // pred_check_branch
          %318 = sbr.rel (%p316) target = $region48
        $region47: #{tpu_custom_call.1} parent=39 // pred_region
          %p319 = scmp.lt.s32.totalorder %s25, 1
          %s320 = scalar_select %p319, %s25, 1
          %p321 = scmp.lt.s32.totalorder %s26, 1
          %s322 = scalar_select %p321, %s26, 1
          %s323 = smul.addr %s320, 2
          %s324 = sadd.s32 %s322, %s323
          %s325 = smul.addr %s324, 4
          %s326 = scalar_lea.vmem %s1, %s325
        $region48: #{tpu_custom_call.1} parent=39 // pred_fallthru
          _
        // Predicated region
        $region49: #{tpu_custom_call.1} parent=39 // pred_check
          %p327 = pneg %p108
        $region50: #{tpu_custom_call.1} parent=39 // pred_check_branch
          %329 = sbr.rel (%p327) target = $region52
        $region51: #{tpu_custom_call.1} parent=39 // pred_region
          %p330 = scmp.lt.s32.totalorder %s25, 1
          %s331 = scalar_select %p330, %s25, 1
          %p332 = scmp.lt.s32.totalorder %s26, 1
          %s333 = scalar_select %p332, %s26, 1
          %s334 = smul.addr %s331, 2
          %s335 = sadd.s32 %s333, %s334
          %s336 = smul.addr %s335, 4
          %s337 = scalar_lea.vmem %s2, %s336
        $region52: #{tpu_custom_call.1} parent=39 // pred_fallthru
          _
      $region40: #{tpu_custom_call.1} parent=5 // pred_fallthru
        _
      %p338 = scmp.le.s32.totalorder 1, %s18
      %p339 = scmp.lt.s32.totalorder %s18, 5
      %p340 = pnand %p338, %p339
      %p341 = pneg %p340
      // Predicated region
      $region53: #{tpu_custom_call.1} parent=5 // pred_check
        _
      $region54: #{tpu_custom_call.1} parent=5 // pred_check_branch
        %343 = sbr.rel (%p340) target = $region56
      $region55: #{tpu_custom_call.1} parent=5 // pred_region
        %s344 = ssub.s32 %s18, 1
        %p345 = scmp.lt.s32.totalorder %s27, 1
        %s346 = scalar_select %p345, %s27, 1
        %p347 = scmp.lt.s32.totalorder %s28, 1
        %s348 = scalar_select %p347, %s28, 1
        %s349 = smul.addr %s346, 2
        %s350 = sadd.s32 %s348, %s349
        %s351 = smul.addr %s350, 4
        %s352 = scalar_lea.vmem %s0, %s351
        %p353 = pneg %p58
        %p354 = pneg %p55
        %p355 = scmp.lt.s32.totalorder %s27, 1
        %s356 = scalar_select %p355, %s27, 1
        %p357 = scmp.lt.s32.totalorder %s28, 1
        %s358 = scalar_select %p357, %s28, 1
        %s359 = smul.addr %s356, 2
        %s360 = sadd.s32 %s358, %s359
        %s361 = smul.addr %s360, 4
        %s362 = scalar_lea.vmem %s1, %s361
        %p363 = pneg %p86
        %p364 = pneg %p83
        %p365 = scmp.lt.s32.totalorder %s27, 1
        %s366 = scalar_select %p365, %s27, 1
        %p367 = scmp.lt.s32.totalorder %s28, 1
        %s368 = scalar_select %p367, %s28, 1
        %s369 = smul.addr %s366, 2
        %s370 = sadd.s32 %s368, %s369
        %s371 = smul.addr %s370, 4
        %s372 = scalar_lea.vmem %s2, %s371
        %p373 = pneg %p114
        %p374 = pneg %p111
        %p375 = pneg %p135
        %p376 = pneg %p132
        %p377 = pneg %p156
        %p378 = pneg %p153
        %p379 = pneg %p177
        %p380 = pneg %p174
        %p381 = pneg %p198
        %p382 = pneg %p195
        %p383 = pneg %p219
        %p384 = pneg %p216
        %p385 = pneg %p240
        %p386 = pneg %p237
        %p387 = pneg %p268
        %p388 = pneg %p265
        %s389 = sand.u32 %s255, 1
        %s390 = scalar_lea.sflag [#allocation3], %s389
        %s391 = sand.u32 %s255, 1
        %s392 = smul.addr %s391, 8
        %s393 = scalar_lea.vmem [#allocation2], %s392
        %p394 = scmp.lt.s32.totalorder %s27, 1
        %s395 = scalar_select %p394, %s27, 1
        %p396 = scmp.lt.s32.totalorder %s28, 1
        %s397 = scalar_select %p396, %s28, 1
        %s398 = smul.addr %s395, 2
        %s399 = sadd.s32 %s397, %s398
        %s400 = smul.addr %s399, 4
        %s401 = scalar_lea.vmem %s0, %s400
        %p402 = scmp.lt.s32.totalorder %s27, 1
        %s403 = scalar_select %p402, %s27, 1
        %p404 = scmp.lt.s32.totalorder %s28, 1
        %s405 = scalar_select %p404, %s28, 1
        %s406 = smul.addr %s403, 2
        %s407 = sadd.s32 %s405, %s406
        %s408 = smul.addr %s407, 4
        %s409 = scalar_lea.vmem %s1, %s408
        %p410 = scmp.lt.s32.totalorder %s27, 1
        %s411 = scalar_select %p410, %s27, 1
        %p412 = scmp.lt.s32.totalorder %s28, 1
        %s413 = scalar_select %p412, %s28, 1
        %s414 = smul.addr %s411, 2
        %s415 = sadd.s32 %s413, %s414
        %s416 = smul.addr %s415, 4
        %s417 = scalar_lea.vmem %s2, %s416
        %v418 = vld [vmem:[%s401] sm:$0xf]
        %v419 = vld [vmem:[%s409] sm:$0xf]
        %v420 = vld [vmem:[%s417] sm:$0xf]
        %422 = vrot.lane.b32.xlu0 %v419, 127
        %v423 = vpop.permute.xlu0 %422
        %426 = vrot.lane.b32.xlu0 %v418, 1
        %v427 = vpop.permute.xlu0 %426
        %vm429 = vcmask 7168
        %v430 = vsel %vm429, %v423, %v427
        %431 = vrot.lane.b32.xlu0 %v418, 127
        %v432 = vpop.permute.xlu0 %431
        %435 = vrot.lane.b32.xlu0 %v420, 127
        %v436 = vpop.permute.xlu0 %435
        %vm438 = vcmask 1039360
        %v439 = vsel %vm438, %v432, %v436
        %v440 = vld [vmem:[%s3] sm:$0xff]
        %s441 = scalar_lea.vmem %s3, 8
        %v442 = vld [vmem:[%s441] sm:$0xff]
        %vm443 = vcmask 31744
        %v445 = vsel %vm443, %v442, 0
        %vm447 = vcmask 1043456
        %v448 = vsel %vm447, %v418, 0
        %450 = vmatprep.subr.mxu0 0.0
        %451 = vmatpush1.msra.mxu0 %v448
        %452 = vmatprep.subr.mxu0 0.0
        %453 = vmatpush1.msra.mxu0 0.0
        %454 = vmatprep.subr.mxu0 0.0
        %455 = vmatpush1.msra.mxu0 0.0
        %456 = vmatprep.subr.mxu0 0.0
        %457 = vmatpush1.msra.mxu0 0.0
        %458 = vmatprep.subr.mxu0 0.0
        %459 = vmatpush1.msra.mxu0 0.0
        %460 = vmatprep.subr.mxu0 0.0
        %461 = vmatpush1.msra.mxu0 0.0
        %462 = vmatprep.subr.mxu0 0.0
        %463 = vmatpush1.msra.mxu0 0.0
        %464 = vmatprep.subr.mxu0 0.0
        %465 = vmatpush1.msra.mxu0 0.0
        %466 = vmatprep.subr.mxu0 0.0
        %467 = vmatpush1.msra.mxu0 0.0
        %468 = vmatprep.subr.mxu0 0.0
        %469 = vmatpush1.msra.mxu0 0.0
        %470 = vmatprep.subr.mxu0 0.0
        %471 = vmatpush1.msra.mxu0 0.0
        %472 = vmatprep.subr.mxu0 0.0
        %473 = vmatpush1.msra.mxu0 0.0
        %474 = vmatprep.subr.mxu0 0.0
        %475 = vmatpush1.msra.mxu0 0.0
        %476 = vmatprep.subr.mxu0 0.0
        %477 = vmatpush1.msra.mxu0 0.0
        %478 = vmatprep.subr.mxu0 0.0
        %479 = vmatpush1.msra.mxu0 0.0
        %480 = vmatprep.subr.mxu0 0.0
        %481 = vmatpush1.msra.mxu0 0.0
        %482 = vmatprep.subr.mxu0 0.0
        %483 = vmatpush1.msra.mxu0 0.0
        %484 = vmatprep.subr.mxu0 0.0
        %485 = vmatpush1.msra.mxu0 0.0
        %486 = vmatprep.subr.mxu0 0.0
        %487 = vmatpush1.msra.mxu0 0.0
        %488 = vmatprep.subr.mxu0 0.0
        %489 = vmatpush1.msra.mxu0 0.0
        %490 = vmatprep.subr.mxu0 0.0
        %491 = vmatpush1.msra.mxu0 0.0
        %492 = vmatprep.subr.mxu0 0.0
        %493 = vmatpush1.msra.mxu0 0.0
        %494 = vmatprep.subr.mxu0 0.0
        %495 = vmatpush1.msra.mxu0 0.0
        %496 = vmatprep.subr.mxu0 0.0
        %497 = vmatpush1.msra.mxu0 0.0
        %498 = vmatprep.subr.mxu0 0.0
        %499 = vmatpush1.msra.mxu0 0.0
        %500 = vmatprep.subr.mxu0 0.0
        %501 = vmatpush1.msra.mxu0 0.0
        %502 = vmatprep.subr.mxu0 0.0
        %503 = vmatpush1.msra.mxu0 0.0
        %504 = vmatprep.subr.mxu0 0.0
        %505 = vmatpush1.msra.mxu0 0.0
        %506 = vmatprep.subr.mxu0 0.0
        %507 = vmatpush1.msra.mxu0 0.0
        %508 = vmatprep.subr.mxu0 0.0
        %509 = vmatpush1.msra.mxu0 0.0
        %510 = vmatprep.subr.mxu0 0.0
        %511 = vmatpush1.msra.mxu0 0.0
        %512 = vmatprep.subr.mxu0 0.0
        %513 = vmatpush1.msra.mxu0 0.0
        %514 = vmatprep.mubr.f32.mxu0 0.0
        %515 = vmatmul.mubr.f32.gmra.mrb[0].mxu0 %v445
        %v516 = vpop.f32.mrb[0].mxu0
        %v517 = vadd.f32 0.0, %v516
        %v518 = vpop.f32.mrb[0].mxu0
        %519 = vdwg.mxu0
        %v521 = vsel %vm443, %v440, 0
        %v524 = vsel %vm447, %v430, 0
        %526 = vmatprep.subr.mxu0 0.0
        %527 = vmatpush1.msra.mxu0 %v524
        %528 = vmatprep.subr.mxu0 0.0
        %529 = vmatpush1.msra.mxu0 0.0
        %530 = vmatprep.subr.mxu0 0.0
        %531 = vmatpush1.msra.mxu0 0.0
        %532 = vmatprep.subr.mxu0 0.0
        %533 = vmatpush1.msra.mxu0 0.0
        %534 = vmatprep.subr.mxu0 0.0
        %535 = vmatpush1.msra.mxu0 0.0
        %536 = vmatprep.subr.mxu0 0.0
        %537 = vmatpush1.msra.mxu0 0.0
        %538 = vmatprep.subr.mxu0 0.0
        %539 = vmatpush1.msra.mxu0 0.0
        %540 = vmatprep.subr.mxu0 0.0
        %541 = vmatpush1.msra.mxu0 0.0
        %542 = vmatprep.subr.mxu0 0.0
        %543 = vmatpush1.msra.mxu0 0.0
        %544 = vmatprep.subr.mxu0 0.0
        %545 = vmatpush1.msra.mxu0 0.0
        %546 = vmatprep.subr.mxu0 0.0
        %547 = vmatpush1.msra.mxu0 0.0
        %548 = vmatprep.subr.mxu0 0.0
        %549 = vmatpush1.msra.mxu0 0.0
        %550 = vmatprep.subr.mxu0 0.0
        %551 = vmatpush1.msra.mxu0 0.0
        %552 = vmatprep.subr.mxu0 0.0
        %553 = vmatpush1.msra.mxu0 0.0
        %554 = vmatprep.subr.mxu0 0.0
        %555 = vmatpush1.msra.mxu0 0.0
        %556 = vmatprep.subr.mxu0 0.0
        %557 = vmatpush1.msra.mxu0 0.0
        %558 = vmatprep.subr.mxu0 0.0
        %559 = vmatpush1.msra.mxu0 0.0
        %560 = vmatprep.subr.mxu0 0.0
        %561 = vmatpush1.msra.mxu0 0.0
        %562 = vmatprep.subr.mxu0 0.0
        %563 = vmatpush1.msra.mxu0 0.0
        %564 = vmatprep.subr.mxu0 0.0
        %565 = vmatpush1.msra.mxu0 0.0
        %566 = vmatprep.subr.mxu0 0.0
        %567 = vmatpush1.msra.mxu0 0.0
        %568 = vmatprep.subr.mxu0 0.0
        %569 = vmatpush1.msra.mxu0 0.0
        %570 = vmatprep.subr.mxu0 0.0
        %571 = vmatpush1.msra.mxu0 0.0
        %572 = vmatprep.subr.mxu0 0.0
        %573 = vmatpush1.msra.mxu0 0.0
        %574 = vmatprep.subr.mxu0 0.0
        %575 = vmatpush1.msra.mxu0 0.0
        %576 = vmatprep.subr.mxu0 0.0
        %577 = vmatpush1.msra.mxu0 0.0
        %578 = vmatprep.subr.mxu0 0.0
        %579 = vmatpush1.msra.mxu0 0.0
        %580 = vmatprep.subr.mxu0 0.0
        %581 = vmatpush1.msra.mxu0 0.0
        %582 = vmatprep.subr.mxu0 0.0
        %583 = vmatpush1.msra.mxu0 0.0
        %584 = vmatprep.subr.mxu0 0.0
        %585 = vmatpush1.msra.mxu0 0.0
        %586 = vmatprep.subr.mxu0 0.0
        %587 = vmatpush1.msra.mxu0 0.0
        %588 = vmatprep.subr.mxu0 0.0
        %589 = vmatpush1.msra.mxu0 0.0
        %590 = vmatprep.mubr.f32.mxu0 0.0
        %591 = vmatmul.mubr.f32.gmra.mrb[0].mxu0 %v521
        %v592 = vpop.f32.mrb[0].mxu0
        %v593 = vadd.f32 %v517, %v592
        %v594 = vpop.f32.mrb[0].mxu0
        %595 = vdwg.mxu0
        %s596 = scalar_lea.vmem %s3, 16
        %v597 = vld [vmem:[%s596] sm:$0xff]
        %v599 = vsel %vm443, %v597, 0
        %v602 = vsel %vm447, %v439, 0
        %604 = vmatprep.subr.mxu0 0.0
        %605 = vmatpush1.msra.mxu0 %v602
        %606 = vmatprep.subr.mxu0 0.0
        %607 = vmatpush1.msra.mxu0 0.0
        %608 = vmatprep.subr.mxu0 0.0
        %609 = vmatpush1.msra.mxu0 0.0
        %610 = vmatprep.subr.mxu0 0.0
        %611 = vmatpush1.msra.mxu0 0.0
        %612 = vmatprep.subr.mxu0 0.0
        %613 = vmatpush1.msra.mxu0 0.0
        %614 = vmatprep.subr.mxu0 0.0
        %615 = vmatpush1.msra.mxu0 0.0
        %616 = vmatprep.subr.mxu0 0.0
        %617 = vmatpush1.msra.mxu0 0.0
        %618 = vmatprep.subr.mxu0 0.0
        %619 = vmatpush1.msra.mxu0 0.0
        %620 = vmatprep.subr.mxu0 0.0
        %621 = vmatpush1.msra.mxu0 0.0
        %622 = vmatprep.subr.mxu0 0.0
        %623 = vmatpush1.msra.mxu0 0.0
        %624 = vmatprep.subr.mxu0 0.0
        %625 = vmatpush1.msra.mxu0 0.0
        %626 = vmatprep.subr.mxu0 0.0
        %627 = vmatpush1.msra.mxu0 0.0
        %628 = vmatprep.subr.mxu0 0.0
        %629 = vmatpush1.msra.mxu0 0.0
        %630 = vmatprep.subr.mxu0 0.0
        %631 = vmatpush1.msra.mxu0 0.0
        %632 = vmatprep.subr.mxu0 0.0
        %633 = vmatpush1.msra.mxu0 0.0
        %634 = vmatprep.subr.mxu0 0.0
        %635 = vmatpush1.msra.mxu0 0.0
        %636 = vmatprep.subr.mxu0 0.0
        %637 = vmatpush1.msra.mxu0 0.0
        %638 = vmatprep.subr.mxu0 0.0
        %639 = vmatpush1.msra.mxu0 0.0
        %640 = vmatprep.subr.mxu0 0.0
        %641 = vmatpush1.msra.mxu0 0.0
        %642 = vmatprep.subr.mxu0 0.0
        %643 = vmatpush1.msra.mxu0 0.0
        %644 = vmatprep.subr.mxu0 0.0
        %645 = vmatpush1.msra.mxu0 0.0
        %646 = vmatprep.subr.mxu0 0.0
        %647 = vmatpush1.msra.mxu0 0.0
        %648 = vmatprep.subr.mxu0 0.0
        %649 = vmatpush1.msra.mxu0 0.0
        %650 = vmatprep.subr.mxu0 0.0
        %651 = vmatpush1.msra.mxu0 0.0
        %652 = vmatprep.subr.mxu0 0.0
        %653 = vmatpush1.msra.mxu0 0.0
        %654 = vmatprep.subr.mxu0 0.0
        %655 = vmatpush1.msra.mxu0 0.0
        %656 = vmatprep.subr.mxu0 0.0
        %657 = vmatpush1.msra.mxu0 0.0
        %658 = vmatprep.subr.mxu0 0.0
        %659 = vmatpush1.msra.mxu0 0.0
        %660 = vmatprep.subr.mxu0 0.0
        %661 = vmatpush1.msra.mxu0 0.0
        %662 = vmatprep.subr.mxu0 0.0
        %663 = vmatpush1.msra.mxu0 0.0
        %664 = vmatprep.subr.mxu0 0.0
        %665 = vmatpush1.msra.mxu0 0.0
        %666 = vmatprep.subr.mxu0 0.0
        %667 = vmatpush1.msra.mxu0 0.0
        %668 = vmatprep.mubr.f32.mxu0 0.0
        %669 = vmatmul.mubr.f32.gmra.mrb[0].mxu0 %v599
        %v670 = vpop.f32.mrb[0].mxu0
        %v671 = vadd.f32 0.0, %v670
        %v672 = vpop.f32.mrb[0].mxu0
        %673 = vdwg.mxu0
        %v674 = vadd.f32 %v593, %v671
        %v675 = vld [vmem:[%s5] sm:$0xff]
        %677 = vset.pattern.permute.xlu0 0
        %678 = vperm.xlu0 %677, %v675
        %v679 = vpop.permute.xlu0 %678
        %v681 = vadd.f32 %v674, %v679
        %v682 = vmax.f32 %v681, 0.0
        %683 = vrot.lane.b32.xlu0 %v418, 2
        %v684 = vpop.permute.xlu0 %683
        %v686 = vsel %vm429, %v419, %v684
        %687 = vrot.lane.b32.xlu0 %v420, 1
        %v688 = vpop.permute.xlu0 %687
        %v690 = vsel %vm429, %v423, %v688
        %v691 = vsel %vm429, %v418, %v420
        %v693 = vrot.slane %v690, 4
        %v695 = vsel %vm447, %v686, %v693
        %v696 = vld [vmem:[%s4] sm:$0xff]
        %vm697 = vcmask 97280
        %v699 = vsel %vm697, %v696, 0
        %v702 = vsel %vm447, %v691, 0
        %704 = vmatprep.subr.mxu0 0.0
        %705 = vmatpush1.msra.mxu0 %v695
        %706 = vmatprep.subr.mxu0 0.0
        %707 = vmatpush1.msra.mxu0 %v702
        %708 = vmatprep.subr.mxu0 0.0
        %709 = vmatpush1.msra.mxu0 0.0
        %710 = vmatprep.subr.mxu0 0.0
        %711 = vmatpush1.msra.mxu0 0.0
        %712 = vmatprep.subr.mxu0 0.0
        %713 = vmatpush1.msra.mxu0 0.0
        %714 = vmatprep.subr.mxu0 0.0
        %715 = vmatpush1.msra.mxu0 0.0
        %716 = vmatprep.subr.mxu0 0.0
        %717 = vmatpush1.msra.mxu0 0.0
        %718 = vmatprep.subr.mxu0 0.0
        %719 = vmatpush1.msra.mxu0 0.0
        %720 = vmatprep.subr.mxu0 0.0
        %721 = vmatpush1.msra.mxu0 0.0
        %722 = vmatprep.subr.mxu0 0.0
        %723 = vmatpush1.msra.mxu0 0.0
        %724 = vmatprep.subr.mxu0 0.0
        %725 = vmatpush1.msra.mxu0 0.0
        %726 = vmatprep.subr.mxu0 0.0
        %727 = vmatpush1.msra.mxu0 0.0
        %728 = vmatprep.subr.mxu0 0.0
        %729 = vmatpush1.msra.mxu0 0.0
        %730 = vmatprep.subr.mxu0 0.0
        %731 = vmatpush1.msra.mxu0 0.0
        %732 = vmatprep.subr.mxu0 0.0
        %733 = vmatpush1.msra.mxu0 0.0
        %734 = vmatprep.subr.mxu0 0.0
        %735 = vmatpush1.msra.mxu0 0.0
        %736 = vmatprep.subr.mxu0 0.0
        %737 = vmatpush1.msra.mxu0 0.0
        %738 = vmatprep.subr.mxu0 0.0
        %739 = vmatpush1.msra.mxu0 0.0
        %740 = vmatprep.subr.mxu0 0.0
        %741 = vmatpush1.msra.mxu0 0.0
        %742 = vmatprep.subr.mxu0 0.0
        %743 = vmatpush1.msra.mxu0 0.0
        %744 = vmatprep.subr.mxu0 0.0
        %745 = vmatpush1.msra.mxu0 0.0
        %746 = vmatprep.subr.mxu0 0.0
        %747 = vmatpush1.msra.mxu0 0.0
        %748 = vmatprep.subr.mxu0 0.0
        %749 = vmatpush1.msra.mxu0 0.0
        %750 = vmatprep.subr.mxu0 0.0
        %751 = vmatpush1.msra.mxu0 0.0
        %752 = vmatprep.subr.mxu0 0.0
        %753 = vmatpush1.msra.mxu0 0.0
        %754 = vmatprep.subr.mxu0 0.0
        %755 = vmatpush1.msra.mxu0 0.0
        %756 = vmatprep.subr.mxu0 0.0
        %757 = vmatpush1.msra.mxu0 0.0
        %758 = vmatprep.subr.mxu0 0.0
        %759 = vmatpush1.msra.mxu0 0.0
        %760 = vmatprep.subr.mxu0 0.0
        %761 = vmatpush1.msra.mxu0 0.0
        %762 = vmatprep.subr.mxu0 0.0
        %763 = vmatpush1.msra.mxu0 0.0
        %764 = vmatprep.subr.mxu0 0.0
        %765 = vmatpush1.msra.mxu0 0.0
        %766 = vmatprep.subr.mxu0 0.0
        %767 = vmatpush1.msra.mxu0 0.0
        %768 = vmatprep.mubr.f32.mxu0 0.0
        %769 = vmatmul.mubr.f32.gmra.mrb[0].mxu0 %v699
        %v770 = vpop.f32.mrb[0].mxu0
        %v771 = vadd.f32 %v679, %v770
        %v772 = vpop.f32.mrb[0].mxu0
        %773 = vdwg.mxu0
        %v774 = vmax.f32 %v771, 0.0
        %p775 = scmp.gt.s32.totalorder %s28, 0
        %s776 = scalar_select %p775, 1, 0
        %s777 = scvt.s32.f32 %s776
        %v778 = vstv %s777
        %v779 = vmul.f32 %v774, %v778
        %p780 = scmp.lt.s32.totalorder %s28, 1
        %s781 = scalar_select %p780, 1, 0
        %s782 = scvt.s32.f32 %s781
        %v783 = vstv %s782
        %v784 = vmul.f32 %v774, %v783
        %v785 = vld [vmem:[%s7] sm:$0xff]
        %v786 = vld [vmem:[%s8] sm:$0xff]
        %788 = vset.pattern.permute.xlu0 0
        %789 = vperm.xlu0 %788, %v786
        %v790 = vpop.permute.xlu0 %789
        %v793 = vsel %vm443, %v785, 0
        %795 = vmatprep.subr.mxu0 0.0
        %796 = vmatpush1.msra.mxu0 %v448
        %797 = vmatprep.subr.mxu0 0.0
        %798 = vmatpush1.msra.mxu0 0.0
        %799 = vmatprep.subr.mxu0 0.0
        %800 = vmatpush1.msra.mxu0 0.0
        %801 = vmatprep.subr.mxu0 0.0
        %802 = vmatpush1.msra.mxu0 0.0
        %803 = vmatprep.subr.mxu0 0.0
        %804 = vmatpush1.msra.mxu0 0.0
        %805 = vmatprep.subr.mxu0 0.0
        %806 = vmatpush1.msra.mxu0 0.0
        %807 = vmatprep.subr.mxu0 0.0
        %808 = vmatpush1.msra.mxu0 0.0
        %809 = vmatprep.subr.mxu0 0.0
        %810 = vmatpush1.msra.mxu0 0.0
        %811 = vmatprep.subr.mxu0 0.0
        %812 = vmatpush1.msra.mxu0 0.0
        %813 = vmatprep.subr.mxu0 0.0
        %814 = vmatpush1.msra.mxu0 0.0
        %815 = vmatprep.subr.mxu0 0.0
        %816 = vmatpush1.msra.mxu0 0.0
        %817 = vmatprep.subr.mxu0 0.0
        %818 = vmatpush1.msra.mxu0 0.0
        %819 = vmatprep.subr.mxu0 0.0
        %820 = vmatpush1.msra.mxu0 0.0
        %821 = vmatprep.subr.mxu0 0.0
        %822 = vmatpush1.msra.mxu0 0.0
        %823 = vmatprep.subr.mxu0 0.0
        %824 = vmatpush1.msra.mxu0 0.0
        %825 = vmatprep.subr.mxu0 0.0
        %826 = vmatpush1.msra.mxu0 0.0
        %827 = vmatprep.subr.mxu0 0.0
        %828 = vmatpush1.msra.mxu0 0.0
        %829 = vmatprep.subr.mxu0 0.0
        %830 = vmatpush1.msra.mxu0 0.0
        %831 = vmatprep.subr.mxu0 0.0
        %832 = vmatpush1.msra.mxu0 0.0
        %833 = vmatprep.subr.mxu0 0.0
        %834 = vmatpush1.msra.mxu0 0.0
        %835 = vmatprep.subr.mxu0 0.0
        %836 = vmatpush1.msra.mxu0 0.0
        %837 = vmatprep.subr.mxu0 0.0
        %838 = vmatpush1.msra.mxu0 0.0
        %839 = vmatprep.subr.mxu0 0.0
        %840 = vmatpush1.msra.mxu0 0.0
        %841 = vmatprep.subr.mxu0 0.0
        %842 = vmatpush1.msra.mxu0 0.0
        %843 = vmatprep.subr.mxu0 0.0
        %844 = vmatpush1.msra.mxu0 0.0
        %845 = vmatprep.subr.mxu0 0.0
        %846 = vmatpush1.msra.mxu0 0.0
        %847 = vmatprep.subr.mxu0 0.0
        %848 = vmatpush1.msra.mxu0 0.0
        %849 = vmatprep.subr.mxu0 0.0
        %850 = vmatpush1.msra.mxu0 0.0
        %851 = vmatprep.subr.mxu0 0.0
        %852 = vmatpush1.msra.mxu0 0.0
        %853 = vmatprep.subr.mxu0 0.0
        %854 = vmatpush1.msra.mxu0 0.0
        %855 = vmatprep.subr.mxu0 0.0
        %856 = vmatpush1.msra.mxu0 0.0
        %857 = vmatprep.subr.mxu0 0.0
        %858 = vmatpush1.msra.mxu0 0.0
        %859 = vmatprep.mubr.f32.mxu0 0.0
        %860 = vmatmul.mubr.f32.gmra.mrb[0].mxu0 %v793
        %v861 = vpop.f32.mrb[0].mxu0
        %v862 = vadd.f32 %v790, %v861
        %v863 = vpop.f32.mrb[0].mxu0
        %864 = vdwg.mxu0
        %866 = vrot.lane.b32.xlu0 %v682, 1
        %v867 = vpop.permute.xlu0 %866
        %v869 = vsel %vm429, %v779, %v867
        %v870 = vld [vmem:[%s6] sm:$0xff]
        %vm871 = vcmask 64512
        %v873 = vsel %vm871, %v870, 0
        %875 = vmatprep.subr.mxu0 0.0
        %876 = vmatpush1.msra.mxu0 %v869
        %877 = vmatprep.subr.mxu0 0.0
        %878 = vmatpush1.msra.mxu0 0.0
        %879 = vmatprep.subr.mxu0 0.0
        %880 = vmatpush1.msra.mxu0 0.0
        %881 = vmatprep.subr.mxu0 0.0
        %882 = vmatpush1.msra.mxu0 0.0
        %883 = vmatprep.subr.mxu0 0.0
        %884 = vmatpush1.msra.mxu0 0.0
        %885 = vmatprep.subr.mxu0 0.0
        %886 = vmatpush1.msra.mxu0 0.0
        %887 = vmatprep.subr.mxu0 0.0
        %888 = vmatpush1.msra.mxu0 0.0
        %889 = vmatprep.subr.mxu0 0.0
        %890 = vmatpush1.msra.mxu0 0.0
        %891 = vmatprep.subr.mxu0 0.0
        %892 = vmatpush1.msra.mxu0 0.0
        %893 = vmatprep.subr.mxu0 0.0
        %894 = vmatpush1.msra.mxu0 0.0
        %895 = vmatprep.subr.mxu0 0.0
        %896 = vmatpush1.msra.mxu0 0.0
        %897 = vmatprep.subr.mxu0 0.0
        %898 = vmatpush1.msra.mxu0 0.0
        %899 = vmatprep.subr.mxu0 0.0
        %900 = vmatpush1.msra.mxu0 0.0
        %901 = vmatprep.subr.mxu0 0.0
        %902 = vmatpush1.msra.mxu0 0.0
        %903 = vmatprep.subr.mxu0 0.0
        %904 = vmatpush1.msra.mxu0 0.0
        %905 = vmatprep.subr.mxu0 0.0
        %906 = vmatpush1.msra.mxu0 0.0
        %907 = vmatprep.subr.mxu0 0.0
        %908 = vmatpush1.msra.mxu0 0.0
        %909 = vmatprep.subr.mxu0 0.0
        %910 = vmatpush1.msra.mxu0 0.0
        %911 = vmatprep.subr.mxu0 0.0
        %912 = vmatpush1.msra.mxu0 0.0
        %913 = vmatprep.subr.mxu0 0.0
        %914 = vmatpush1.msra.mxu0 0.0
        %915 = vmatprep.subr.mxu0 0.0
        %916 = vmatpush1.msra.mxu0 0.0
        %917 = vmatprep.subr.mxu0 0.0
        %918 = vmatpush1.msra.mxu0 0.0
        %919 = vmatprep.subr.mxu0 0.0
        %920 = vmatpush1.msra.mxu0 0.0
        %921 = vmatprep.subr.mxu0 0.0
        %922 = vmatpush1.msra.mxu0 0.0
        %923 = vmatprep.subr.mxu0 0.0
        %924 = vmatpush1.msra.mxu0 0.0
        %925 = vmatprep.subr.mxu0 0.0
        %926 = vmatpush1.msra.mxu0 0.0
        %927 = vmatprep.subr.mxu0 0.0
        %928 = vmatpush1.msra.mxu0 0.0
        %929 = vmatprep.subr.mxu0 0.0
        %930 = vmatpush1.msra.mxu0 0.0
        %931 = vmatprep.subr.mxu0 0.0
        %932 = vmatpush1.msra.mxu0 0.0
        %933 = vmatprep.subr.mxu0 0.0
        %934 = vmatpush1.msra.mxu0 0.0
        %935 = vmatprep.subr.mxu0 0.0
        %936 = vmatpush1.msra.mxu0 0.0
        %937 = vmatprep.subr.mxu0 0.0
        %938 = vmatpush1.msra.mxu0 0.0
        %939 = vmatprep.mubr.f32.mxu0 0.0
        %940 = vmatmul.mubr.f32.gmra.mrb[0].mxu0 %v873
        %v941 = vpop.f32.mrb[0].mxu0
        %v942 = vadd.f32 0.0, %v941
        %v943 = vpop.f32.mrb[0].mxu0
        %944 = vdwg.mxu0
        %v945 = vadd.f32 %v862, %v942
        %s946 = scalar_lea.vmem %s6, 8
        %v947 = vld [vmem:[%s946] sm:$0xff]
        %v949 = vsel %vm871, %v947, 0
        %951 = vmatprep.subr.mxu0 0.0
        %952 = vmatpush1.msra.mxu0 %v682
        %953 = vmatprep.subr.mxu0 0.0
        %954 = vmatpush1.msra.mxu0 0.0
        %955 = vmatprep.subr.mxu0 0.0
        %956 = vmatpush1.msra.mxu0 0.0
        %957 = vmatprep.subr.mxu0 0.0
        %958 = vmatpush1.msra.mxu0 0.0
        %959 = vmatprep.subr.mxu0 0.0
        %960 = vmatpush1.msra.mxu0 0.0
        %961 = vmatprep.subr.mxu0 0.0
        %962 = vmatpush1.msra.mxu0 0.0
        %963 = vmatprep.subr.mxu0 0.0
        %964 = vmatpush1.msra.mxu0 0.0
        %965 = vmatprep.subr.mxu0 0.0
        %966 = vmatpush1.msra.mxu0 0.0
        %967 = vmatprep.subr.mxu0 0.0
        %968 = vmatpush1.msra.mxu0 0.0
        %969 = vmatprep.subr.mxu0 0.0
        %970 = vmatpush1.msra.mxu0 0.0
        %971 = vmatprep.subr.mxu0 0.0
        %972 = vmatpush1.msra.mxu0 0.0
        %973 = vmatprep.subr.mxu0 0.0
        %974 = vmatpush1.msra.mxu0 0.0
        %975 = vmatprep.subr.mxu0 0.0
        %976 = vmatpush1.msra.mxu0 0.0
        %977 = vmatprep.subr.mxu0 0.0
        %978 = vmatpush1.msra.mxu0 0.0
        %979 = vmatprep.subr.mxu0 0.0
        %980 = vmatpush1.msra.mxu0 0.0
        %981 = vmatprep.subr.mxu0 0.0
        %982 = vmatpush1.msra.mxu0 0.0
        %983 = vmatprep.subr.mxu0 0.0
        %984 = vmatpush1.msra.mxu0 0.0
        %985 = vmatprep.subr.mxu0 0.0
        %986 = vmatpush1.msra.mxu0 0.0
        %987 = vmatprep.subr.mxu0 0.0
        %988 = vmatpush1.msra.mxu0 0.0
        %989 = vmatprep.subr.mxu0 0.0
        %990 = vmatpush1.msra.mxu0 0.0
        %991 = vmatprep.subr.mxu0 0.0
        %992 = vmatpush1.msra.mxu0 0.0
        %993 = vmatprep.subr.mxu0 0.0
        %994 = vmatpush1.msra.mxu0 0.0
        %995 = vmatprep.subr.mxu0 0.0
        %996 = vmatpush1.msra.mxu0 0.0
        %997 = vmatprep.subr.mxu0 0.0
        %998 = vmatpush1.msra.mxu0 0.0
        %999 = vmatprep.subr.mxu0 0.0
        %1000 = vmatpush1.msra.mxu0 0.0
        %1001 = vmatprep.subr.mxu0 0.0
        %1002 = vmatpush1.msra.mxu0 0.0
        %1003 = vmatprep.subr.mxu0 0.0
        %1004 = vmatpush1.msra.mxu0 0.0
        %1005 = vmatprep.subr.mxu0 0.0
        %1006 = vmatpush1.msra.mxu0 0.0
        %1007 = vmatprep.subr.mxu0 0.0
        %1008 = vmatpush1.msra.mxu0 0.0
        %1009 = vmatprep.subr.mxu0 0.0
        %1010 = vmatpush1.msra.mxu0 0.0
        %1011 = vmatprep.subr.mxu0 0.0
        %1012 = vmatpush1.msra.mxu0 0.0
        %1013 = vmatprep.subr.mxu0 0.0
        %1014 = vmatpush1.msra.mxu0 0.0
        %1015 = vmatprep.mubr.f32.mxu0 0.0
        %1016 = vmatmul.mubr.f32.gmra.mrb[0].mxu0 %v949
        %v1017 = vpop.f32.mrb[0].mxu0
        %v1018 = vadd.f32 0.0, %v1017
        %v1019 = vpop.f32.mrb[0].mxu0
        %1020 = vdwg.mxu0
        %v1021 = vadd.f32 %v945, %v1018
        %1022 = vrot.lane.b32.xlu0 %v682, 127
        %v1023 = vpop.permute.xlu0 %1022
        %1026 = vrot.lane.b32.xlu0 %v784, 126
        %v1027 = vpop.permute.xlu0 %1026
        %v1029 = vsel %vm438, %v1023, %v1027
        %s1030 = scalar_lea.vmem %s6, 16
        %v1031 = vld [vmem:[%s1030] sm:$0xff]
        %v1033 = vsel %vm871, %v1031, 0
        %1035 = vmatprep.subr.mxu0 0.0
        %1036 = vmatpush1.msra.mxu0 %v1029
        %1037 = vmatprep.subr.mxu0 0.0
        %1038 = vmatpush1.msra.mxu0 0.0
        %1039 = vmatprep.subr.mxu0 0.0
        %1040 = vmatpush1.msra.mxu0 0.0
        %1041 = vmatprep.subr.mxu0 0.0
        %1042 = vmatpush1.msra.mxu0 0.0
        %1043 = vmatprep.subr.mxu0 0.0
        %1044 = vmatpush1.msra.mxu0 0.0
        %1045 = vmatprep.subr.mxu0 0.0
        %1046 = vmatpush1.msra.mxu0 0.0
        %1047 = vmatprep.subr.mxu0 0.0
        %1048 = vmatpush1.msra.mxu0 0.0
        %1049 = vmatprep.subr.mxu0 0.0
        %1050 = vmatpush1.msra.mxu0 0.0
        %1051 = vmatprep.subr.mxu0 0.0
        %1052 = vmatpush1.msra.mxu0 0.0
        %1053 = vmatprep.subr.mxu0 0.0
        %1054 = vmatpush1.msra.mxu0 0.0
        %1055 = vmatprep.subr.mxu0 0.0
        %1056 = vmatpush1.msra.mxu0 0.0
        %1057 = vmatprep.subr.mxu0 0.0
        %1058 = vmatpush1.msra.mxu0 0.0
        %1059 = vmatprep.subr.mxu0 0.0
        %1060 = vmatpush1.msra.mxu0 0.0
        %1061 = vmatprep.subr.mxu0 0.0
        %1062 = vmatpush1.msra.mxu0 0.0
        %1063 = vmatprep.subr.mxu0 0.0
        %1064 = vmatpush1.msra.mxu0 0.0
        %1065 = vmatprep.subr.mxu0 0.0
        %1066 = vmatpush1.msra.mxu0 0.0
        %1067 = vmatprep.subr.mxu0 0.0
        %1068 = vmatpush1.msra.mxu0 0.0
        %1069 = vmatprep.subr.mxu0 0.0
        %1070 = vmatpush1.msra.mxu0 0.0
        %1071 = vmatprep.subr.mxu0 0.0
        %1072 = vmatpush1.msra.mxu0 0.0
        %1073 = vmatprep.subr.mxu0 0.0
        %1074 = vmatpush1.msra.mxu0 0.0
        %1075 = vmatprep.subr.mxu0 0.0
        %1076 = vmatpush1.msra.mxu0 0.0
        %1077 = vmatprep.subr.mxu0 0.0
        %1078 = vmatpush1.msra.mxu0 0.0
        %1079 = vmatprep.subr.mxu0 0.0
        %1080 = vmatpush1.msra.mxu0 0.0
        %1081 = vmatprep.subr.mxu0 0.0
        %1082 = vmatpush1.msra.mxu0 0.0
        %1083 = vmatprep.subr.mxu0 0.0
        %1084 = vmatpush1.msra.mxu0 0.0
        %1085 = vmatprep.subr.mxu0 0.0
        %1086 = vmatpush1.msra.mxu0 0.0
        %1087 = vmatprep.subr.mxu0 0.0
        %1088 = vmatpush1.msra.mxu0 0.0
        %1089 = vmatprep.subr.mxu0 0.0
        %1090 = vmatpush1.msra.mxu0 0.0
        %1091 = vmatprep.subr.mxu0 0.0
        %1092 = vmatpush1.msra.mxu0 0.0
        %1093 = vmatprep.subr.mxu0 0.0
        %1094 = vmatpush1.msra.mxu0 0.0
        %1095 = vmatprep.subr.mxu0 0.0
        %1096 = vmatpush1.msra.mxu0 0.0
        %1097 = vmatprep.subr.mxu0 0.0
        %1098 = vmatpush1.msra.mxu0 0.0
        %1099 = vmatprep.mubr.f32.mxu0 0.0
        %1100 = vmatmul.mubr.f32.gmra.mrb[0].mxu0 %v1033
        %v1101 = vpop.f32.mrb[0].mxu0
        %v1102 = vadd.f32 0.0, %v1101
        %v1103 = vpop.f32.mrb[0].mxu0
        %1104 = vdwg.mxu0
        %v1105 = vadd.f32 %v1021, %v1102
        %v1106 = vmax.f32 %v1105, 0.0
        %1107 = vst [vmem:[%s393] sm:$0xff] %v1106
        %s1108 = sand.u32 %s255, 1
        %s1109 = scalar_lea.sflag [#allocation3], %s1108
        %s1110 = sand.u32 %s255, 1
        %s1111 = smul.addr %s1110, 8
        %s1112 = scalar_lea.vmem [#allocation2], %s1111
        // Predicated region
        $region57: #{tpu_custom_call.1} parent=55 // pred_check
          %p1113 = pneg %p265
        $region58: #{tpu_custom_call.1} parent=55 // pred_check_branch
          %1115 = sbr.rel (%p1113) target = $region60
        $region59: #{tpu_custom_call.1} parent=55 // pred_region
          %s1117 = ssub.s32 128, 128
          %1118 = vsyncadd %s1109, %s1117
          %s1119 = smul.addr %s27, 2
          %s1120 = sadd.s32 %s28, %s1119
          %s1121 = smul.addr %s1120, 128
          %s1122 = scalar_lea.hbm %s9, %s1121
          %s1124 = sshll.u32 %s1112, 4
          %s1125 = int_to_ptr.vmem [resolvable:$true] %s1124
          %1127 = dma.vmem_to_hbm [thread:$0]  %s1125, 128, %s1122, %s1109
        $region60: #{tpu_custom_call.1} parent=55 // pred_fallthru
          _
      $region56: #{tpu_custom_call.1} parent=5 // pred_fallthru
        _
      %p1128 = scmp.le.s32.totalorder 2, %s18
      // Predicated region
      $region61: #{tpu_custom_call.1} parent=5 // pred_check
        %p1129 = pneg %p1128
      $region62: #{tpu_custom_call.1} parent=5 // pred_check_branch
        %1131 = sbr.rel (%p1129) target = $region64
      $region63: #{tpu_custom_call.1} parent=5 // pred_region
        %s1132 = ssub.s32 %s18, 2
        // Predicated region
        $region65: #{tpu_custom_call.1} parent=63 // pred_check
          %p1133 = pneg %p271
        $region66: #{tpu_custom_call.1} parent=63 // pred_check_branch
          %1135 = sbr.rel (%p1133) target = $region68
        $region67: #{tpu_custom_call.1} parent=63 // pred_region
          %s1136 = sand.u32 %s256, 1
          %s1137 = scalar_lea.sflag [#allocation3], %s1136
          %s1138 = sand.u32 %s256, 1
          %s1139 = smul.addr %s1138, 8
          %s1140 = scalar_lea.vmem [#allocation2], %s1139
          %1141 = dma.done %s1137, 128
        $region68: #{tpu_custom_call.1} parent=63 // pred_fallthru
          _
      $region64: #{tpu_custom_call.1} parent=5 // pred_fallthru
        _
    $region6: #{tpu_custom_call.1} parent=1 // loop_footer
      %s22 = sadd.s32 1, %s18
    $region7: #{tpu_custom_call.1} parent=1 // loop_footer_branch
      %17 = sbr.rel target = $region3
    $region8: #{tpu_custom_call.1} parent=1 // loop_exit
      _
    %1142 = vsyncpa [#allocation3], 1
    %s1143 = scalar_lea.sflag [#allocation3], 1
    %1144 = vsyncpa %s1143, 1

</llo_original>
